<compile_context>
chip_gen: v5e
topology: v5e:2x2
jax: 0.10.0
libtpu: 0.0.40
codegen_flags: <defaults>
</compile_context>

<pallas_src>
import numpy as np
import jax
import jax.numpy as jnp
from jax.experimental import pallas as pl
from jax.experimental.pallas import tpu as pltpu


# ----------------------------------------------------------------------------
# Bilinear interpolation matrix (PyTorch align_corners=False semantics)
# ----------------------------------------------------------------------------
def bilinear_matrix(in_size: int, out_size: int) -> np.ndarray:
    """W such that out = W @ x reproduces torch Upsample(bilinear, align_corners=False)."""
    w = np.zeros((out_size, in_size), dtype=np.float32)
    scale = in_size / out_size
    for o in range(out_size):
        src = max((o + 0.5) * scale - 0.5, 0.0)      # PyTorch clamps the source coord at 0
        i0 = min(int(np.floor(src)), in_size - 1)
        i1 = min(i0 + 1, in_size - 1)
        lam = src - i0
        w[o, i0] += 1.0 - lam
        w[o, i1] += lam
    return w


def _padded_shifted_interp(in_size: int, out_size: int) -> np.ndarray:
    """out[d, p, h] = W[p + d - 1, h] if 0 <= p + d - 1 < out_size else 0  (d in {0,1,2}).

    I.e. the bilinear interp matrix with the conv tap shift and the conv's
    zero padding folded in, one copy per tap offset.
    """
    wmat = bilinear_matrix(in_size, out_size)                       # (out, in)
    wpad = np.zeros((out_size + 2, in_size), dtype=np.float32)
    wpad[1:1 + out_size] = wmat
    return np.stack([wpad[d:d + out_size] for d in range(3)])       # (3, out, in)


# ----------------------------------------------------------------------------
# Fused kernel: 6 matmuls per image, accumulate in-place into the output block
# ----------------------------------------------------------------------------
def _fused_upsample_conv_kernel(x_ref, wwt_ref, kd_ref, b_ref, o_ref):
    # x_ref   : (1, C_in*H, W)
    # wwt_ref : (3, W, W2)               column interp, dx shift + pad baked in
    # kd_ref  : (3, C_out*H2, C_in*H)    row interp + dy shift + pad + channel mix
    # b_ref   : (C_out*H2, 1)            bias, pre-repeated over H2
    # o_ref   : (1, C_out*H2, W2)        NCHW-contiguous output block (f32 VMEM)
    x2d = x_ref[0]                                               # (C_in*H, W)

    cu = jnp.dot(x2d, wwt_ref[0], preferred_element_type=jnp.float32)
    o_ref[0] = b_ref[...] + jnp.dot(kd_ref[0], cu,
                                    preferred_element_type=jnp.float32)
    for dx in (1, 2):
        cu = jnp.dot(x2d, wwt_ref[dx], preferred_element_type=jnp.float32)
        o_ref[0] += jnp.dot(kd_ref[dx], cu,
                            preferred_element_type=jnp.float32)


def upsample_conv_forward(x, weight, bias):
    """x: (N, C_in, H, W); weight: (C_out, C_in, 3, 3); bias: (C_out,) -> (N, C_out, 2H, 2W)."""
    n, c_in, h, w = x.shape
    c_out = weight.shape[0]
    h2, w2 = 2 * h, 2 * w

    # ---- host / XLA-side precompute (shape-static interp matrices) ----------
    # Column interp with dx shift folded in: wwt[dx, w, q] = Ww_pad[q + dx - 1, w]
    wwt = jnp.asarray(np.transpose(_padded_shifted_interp(w, w2), (0, 2, 1)))   # (3, W, W2)

    # Row interp + dy shift fused with the conv channel-mix weights:
    #   kd[dx, co*H2+p, ci*H+h] = sum_dy weight[co,ci,dy,dx] * Wh_pad[p+dy-1, h]
    wh_shift = jnp.asarray(_padded_shifted_interp(h, h2))                        # (3, H2, H)
    kd = jnp.einsum('oiyx,yph->xopih', weight, wh_shift,
                    precision=jax.lax.Precision.HIGHEST)
    kd = kd.reshape(3, c_out * h2, c_in * h)

    b_col = jnp.repeat(bias, h2).reshape(c_out * h2, 1)          # bias[co] at row co*H2+p
    x2d = x.reshape(n, c_in * h, w)                               # metadata-only reshape

    out = pl.pallas_call(
        _fused_upsample_conv_kernel,
        out_shape=jax.ShapeDtypeStruct((n, c_out * h2, w2), jnp.float32),
        grid=(n,),
        in_specs=[
            pl.BlockSpec((1, c_in * h, w), lambda i: (i, 0, 0)),
            pl.BlockSpec((3, w, w2), lambda i: (0, 0, 0)),
            pl.BlockSpec((3, c_out * h2, c_in * h), lambda i: (0, 0, 0)),
            pl.BlockSpec((c_out * h2, 1), lambda i: (0, 0)),
        ],
        out_specs=pl.BlockSpec((1, c_out * h2, w2), lambda i: (i, 0, 0)),
        compiler_params=pltpu.CompilerParams(
            dimension_semantics=("parallel",)),
    )(x2d, wwt, kd, b_col)

    # Kernel output is already NCHW-contiguous; this reshape is metadata-only.
    return out.reshape(n, c_out, h2, w2)


# ----------------------------------------------------------------------------
# Plain-JAX reference
# ----------------------------------------------------------------------------
def reference_forward(x, weight, bias):
    wh = jnp.asarray(bilinear_matrix(x.shape[2], 2 * x.shape[2]))
    ww = jnp.asarray(bilinear_matrix(x.shape[3], 2 * x.shape[3]))
    up = jnp.einsum('ph,nchw,qw->ncpq', wh, x, ww,
                    precision=jax.lax.Precision.HIGHEST)
    y = jax.lax.conv_general_dilated(
        up, weight, window_strides=(1, 1), padding=((1, 1), (1, 1)),
        dimension_numbers=('NCHW', 'OIHW', 'NCHW'),
        precision=jax.lax.Precision.HIGHEST)
    return y + bias[None, :, None, None]


if __name__ == "__main__":
    key = jax.random.PRNGKey(0)
    kx, kw, kb = jax.random.split(key, 3)

    N, C_in, H, W = 2, 4, 16, 16
    C_out = 8

    x = jax.random.normal(kx, (N, C_in, H, W), dtype=jnp.float32)
    fan_in = C_in * 3 * 3
    bound = 1.0 / np.sqrt(fan_in)
    weight = jax.random.uniform(kw, (C_out, C_in, 3, 3),
                                minval=-bound, maxval=bound, dtype=jnp.float32)
    bias = jax.random.uniform(kb, (C_out,),
                              minval=-bound, maxval=bound, dtype=jnp.float32)

    fwd = jax.jit(upsample_conv_forward)
    y = fwd(x, weight, bias)
    jax.block_until_ready(y)

    assert y.shape == (N, C_out, 2 * H, 2 * W), y.shape
    assert y.dtype == jnp.float32

    y_ref = reference_forward(x, weight, bias)
    err = float(jnp.max(jnp.abs(y - y_ref)))
    # Tightened tolerance (all-f32 path) so precision regressions are visible.
    assert np.isfinite(err) and err < 1e-3, f"max abs error too large: {err}"

    print("KERNEL_OK")
</pallas_src>

<mosaic_0001>
module attributes {stable_mosaic.version = 11 : i64} {
  func.func @_fused_upsample_conv_kernel(%arg0: i32, %arg1: memref<1x64x16xf32, #tpu.memory_space<vmem>>, %arg2: memref<3x16x32xf32, #tpu.memory_space<vmem>>, %arg3: memref<3x256x64xf32, #tpu.memory_space<vmem>>, %arg4: memref<256x1xf32, #tpu.memory_space<vmem>>, %arg5: memref<1x256x32xf32, #tpu.memory_space<vmem>>) attributes {dimension_semantics = [#tpu.dimension_semantics<parallel>], iteration_bounds = array<i64: 2>, scalar_prefetch = 0 : i64, scratch_operands = 0 : i64, tpu.core_type = #tpu.core_type<tc>, window_params = [{transform_indices = @transform_0, window_bounds = array<i64: 1, 64, 16>}, {pipeline_mode = #tpu.pipeline_mode<synchronous>, transform_indices = @transform_1, window_bounds = array<i64: 3, 16, 32>}, {pipeline_mode = #tpu.pipeline_mode<synchronous>, transform_indices = @transform_2, window_bounds = array<i64: 3, 256, 64>}, {pipeline_mode = #tpu.pipeline_mode<synchronous>, transform_indices = @transform_3, window_bounds = array<i64: 256, 1>}, {transform_indices = @transform_4, window_bounds = array<i64: 1, 256, 32>}]} {
    %c0 = arith.constant 0 : index
    %c0_0 = arith.constant 0 : index
    %c0_1 = arith.constant 0 : index
    %0 = vector.load %arg1[%c0, %c0_0, %c0_1] : memref<1x64x16xf32, #tpu.memory_space<vmem>>, vector<1x64x16xf32>
    %1 = vector.shape_cast %0 : vector<1x64x16xf32> to vector<64x16xf32>
    %c0_2 = arith.constant 0 : index
    %c0_3 = arith.constant 0 : index
    %c0_4 = arith.constant 0 : index
    %2 = vector.load %arg2[%c0_2, %c0_3, %c0_4] : memref<3x16x32xf32, #tpu.memory_space<vmem>>, vector<1x16x32xf32>
    %3 = vector.shape_cast %2 : vector<1x16x32xf32> to vector<16x32xf32>
    %cst = arith.constant dense<0.000000e+00> : vector<64x32xf32>
    %4 = tpu.matmul %1, %3, %cst {dimension_numbers = #tpu.dot_dimension_numbers<[1], [0], [0], [1], [0, 0, 1, 1], [], []>} : vector<64x16xf32>, vector<16x32xf32>, vector<64x32xf32> -> vector<64x32xf32>
    %c0_5 = arith.constant 0 : index
    %c0_6 = arith.constant 0 : index
    %5 = vector.load %arg4[%c0_5, %c0_6] : memref<256x1xf32, #tpu.memory_space<vmem>>, vector<256x1xf32>
    %c0_7 = arith.constant 0 : index
    %c0_8 = arith.constant 0 : index
    %c0_9 = arith.constant 0 : index
    %6 = vector.load %arg3[%c0_7, %c0_8, %c0_9] : memref<3x256x64xf32, #tpu.memory_space<vmem>>, vector<1x256x64xf32>
    %7 = vector.shape_cast %6 : vector<1x256x64xf32> to vector<256x64xf32>
    %cst_10 = arith.constant dense<0.000000e+00> : vector<256x32xf32>
    %8 = tpu.matmul %7, %4, %cst_10 {dimension_numbers = #tpu.dot_dimension_numbers<[1], [0], [0], [1], [0, 0, 1, 1], [], []>} : vector<256x64xf32>, vector<64x32xf32>, vector<256x32xf32> -> vector<256x32xf32>
    %9 = vector.broadcast %5 : vector<256x1xf32> to vector<256x32xf32>
    %10 = arith.addf %9, %8 : vector<256x32xf32>
    %c0_11 = arith.constant 0 : index
    %c0_12 = arith.constant 0 : index
    %c0_13 = arith.constant 0 : index
    %11 = vector.load %arg5[%c0_11, %c0_12, %c0_13] : memref<1x256x32xf32, #tpu.memory_space<vmem>>, vector<1x256x32xf32>
    %12 = vector.shape_cast %11 : vector<1x256x32xf32> to vector<256x32xf32>
    %13 = vector.shape_cast %10 : vector<256x32xf32> to vector<1x256x32xf32>
    tpu.vector_store %arg5[%c0_11, %c0_12, %c0_13], %13 {strides = array<i32>} : memref<1x256x32xf32, #tpu.memory_space<vmem>>, vector<1x256x32xf32>,
    %c1 = arith.constant 1 : index
    %c0_14 = arith.constant 0 : index
    %c0_15 = arith.constant 0 : index
    %14 = vector.load %arg2[%c1, %c0_14, %c0_15] : memref<3x16x32xf32, #tpu.memory_space<vmem>>, vector<1x16x32xf32>
    %15 = vector.shape_cast %14 : vector<1x16x32xf32> to vector<16x32xf32>
    %cst_16 = arith.constant dense<0.000000e+00> : vector<64x32xf32>
    %16 = tpu.matmul %1, %15, %cst_16 {dimension_numbers = #tpu.dot_dimension_numbers<[1], [0], [0], [1], [0, 0, 1, 1], [], []>} : vector<64x16xf32>, vector<16x32xf32>, vector<64x32xf32> -> vector<64x32xf32>
    %c0_17 = arith.constant 0 : index
    %c0_18 = arith.constant 0 : index
    %c0_19 = arith.constant 0 : index
    %17 = vector.load %arg5[%c0_17, %c0_18, %c0_19] : memref<1x256x32xf32, #tpu.memory_space<vmem>>, vector<1x256x32xf32>
    %18 = vector.shape_cast %17 : vector<1x256x32xf32> to vector<256x32xf32>
    %c1_20 = arith.constant 1 : index
    %c0_21 = arith.constant 0 : index
    %c0_22 = arith.constant 0 : index
    %19 = vector.load %arg3[%c1_20, %c0_21, %c0_22] : memref<3x256x64xf32, #tpu.memory_space<vmem>>, vector<1x256x64xf32>
    %20 = vector.shape_cast %19 : vector<1x256x64xf32> to vector<256x64xf32>
    %cst_23 = arith.constant dense<0.000000e+00> : vector<256x32xf32>
    %21 = tpu.matmul %20, %16, %cst_23 {dimension_numbers = #tpu.dot_dimension_numbers<[1], [0], [0], [1], [0, 0, 1, 1], [], []>} : vector<256x64xf32>, vector<64x32xf32>, vector<256x32xf32> -> vector<256x32xf32>
    %22 = arith.addf %18, %21 : vector<256x32xf32>
    %c0_24 = arith.constant 0 : index
    %c0_25 = arith.constant 0 : index
    %c0_26 = arith.constant 0 : index
    %23 = vector.load %arg5[%c0_24, %c0_25, %c0_26] : memref<1x256x32xf32, #tpu.memory_space<vmem>>, vector<1x256x32xf32>
    %24 = vector.shape_cast %23 : vector<1x256x32xf32> to vector<256x32xf32>
    %25 = vector.shape_cast %22 : vector<256x32xf32> to vector<1x256x32xf32>
    tpu.vector_store %arg5[%c0_24, %c0_25, %c0_26], %25 {strides = array<i32>} : memref<1x256x32xf32, #tpu.memory_space<vmem>>, vector<1x256x32xf32>,
    %c2 = arith.constant 2 : index
    %c0_27 = arith.constant 0 : index
    %c0_28 = arith.constant 0 : index
    %26 = vector.load %arg2[%c2, %c0_27, %c0_28] : memref<3x16x32xf32, #tpu.memory_space<vmem>>, vector<1x16x32xf32>
    %27 = vector.shape_cast %26 : vector<1x16x32xf32> to vector<16x32xf32>
    %cst_29 = arith.constant dense<0.000000e+00> : vector<64x32xf32>
    %28 = tpu.matmul %1, %27, %cst_29 {dimension_numbers = #tpu.dot_dimension_numbers<[1], [0], [0], [1], [0, 0, 1, 1], [], []>} : vector<64x16xf32>, vector<16x32xf32>, vector<64x32xf32> -> vector<64x32xf32>
    %c0_30 = arith.constant 0 : index
    %c0_31 = arith.constant 0 : index
    %c0_32 = arith.constant 0 : index
    %29 = vector.load %arg5[%c0_30, %c0_31, %c0_32] : memref<1x256x32xf32, #tpu.memory_space<vmem>>, vector<1x256x32xf32>
    %30 = vector.shape_cast %29 : vector<1x256x32xf32> to vector<256x32xf32>
    %c2_33 = arith.constant 2 : index
    %c0_34 = arith.constant 0 : index
    %c0_35 = arith.constant 0 : index
    %31 = vector.load %arg3[%c2_33, %c0_34, %c0_35] : memref<3x256x64xf32, #tpu.memory_space<vmem>>, vector<1x256x64xf32>
    %32 = vector.shape_cast %31 : vector<1x256x64xf32> to vector<256x64xf32>
    %cst_36 = arith.constant dense<0.000000e+00> : vector<256x32xf32>
    %33 = tpu.matmul %32, %28, %cst_36 {dimension_numbers = #tpu.dot_dimension_numbers<[1], [0], [0], [1], [0, 0, 1, 1], [], []>} : vector<256x64xf32>, vector<64x32xf32>, vector<256x32xf32> -> vector<256x32xf32>
    %34 = arith.addf %30, %33 : vector<256x32xf32>
    %c0_37 = arith.constant 0 : index
    %c0_38 = arith.constant 0 : index
    %c0_39 = arith.constant 0 : index
    %35 = vector.load %arg5[%c0_37, %c0_38, %c0_39] : memref<1x256x32xf32, #tpu.memory_space<vmem>>, vector<1x256x32xf32>
    %36 = vector.shape_cast %35 : vector<1x256x32xf32> to vector<256x32xf32>
    %37 = vector.shape_cast %34 : vector<256x32xf32> to vector<1x256x32xf32>
    tpu.vector_store %arg5[%c0_37, %c0_38, %c0_39], %37 {strides = array<i32>} : memref<1x256x32xf32, #tpu.memory_space<vmem>>, vector<1x256x32xf32>,
    return
  }
  func.func @transform_0(%arg0: i32) -> (i32, i32, i32) {
    %c0_i32 = arith.constant 0 : i32
    %c0_i32_0 = arith.constant 0 : i32
    %c0_i32_1 = arith.constant 0 : i32
    return %arg0, %c0_i32, %c0_i32_0 : i32, i32, i32
  }
  func.func @transform_1(%arg0: i32) -> (i32, i32, i32) {
    %c0_i32 = arith.constant 0 : i32
    %c0_i32_0 = arith.constant 0 : i32
    %c0_i32_1 = arith.constant 0 : i32
    %c0_i32_2 = arith.constant 0 : i32
    return %c0_i32, %c0_i32_0, %c0_i32_1 : i32, i32, i32
  }
  func.func @transform_2(%arg0: i32) -> (i32, i32, i32) {
    %c0_i32 = arith.constant 0 : i32
    %c0_i32_0 = arith.constant 0 : i32
    %c0_i32_1 = arith.constant 0 : i32
    %c0_i32_2 = arith.constant 0 : i32
    return %c0_i32, %c0_i32_0, %c0_i32_1 : i32, i32, i32
  }
  func.func @transform_3(%arg0: i32) -> (i32, i32) {
    %c0_i32 = arith.constant 0 : i32
    %c0_i32_0 = arith.constant 0 : i32
    %c0_i32_1 = arith.constant 0 : i32
    return %c0_i32, %c0_i32_0 : i32, i32
  }
  func.func @transform_4(%arg0: i32) -> (i32, i32, i32) {
    %c0_i32 = arith.constant 0 : i32
    %c0_i32_0 = arith.constant 0 : i32
    %c0_i32_1 = arith.constant 0 : i32
    return %arg0, %c0_i32, %c0_i32_0 : i32, i32, i32
  }
}

</mosaic_0001>

<llo_original>
// kernel: upsample_conv_forward.1
$region0: #{upsample_conv_forward.1}
  #allocation0 [shape = 'u32[]', space=smem, size = 0x4, offset = 0x4, fixed_abs, tag = 'smem constant byte address 0x4 - core index']
  #allocation1 [shape = 'u32[72,128]{1,0:T(1,128)}', space=vmem, size = 0x9000, scoped, tag = 'internal scratch']
  %s0 = inlined_call_operand.vmem [shape: f32[2,64,16], index: 0, kind: input, shape index: {}]
  %s1 = inlined_call_operand.vmem [shape: f32[3,16,32], index: 1, kind: input, shape index: {}]
  %s2 = inlined_call_operand.vmem [shape: f32[3,256,64], index: 2, kind: input, shape index: {}]
  %s3 = inlined_call_operand.vmem [shape: f32[256,1], index: 3, kind: input, shape index: {}]
  %s4 = inlined_call_operand.hbm [shape: f32[2,256,32], index: 4, kind: output, shape index: {}]
  %s5 = sld [smem:[#allocation0]]
  $region49: #{upsample_conv_forward.1} parent=0
    _
  %s7 = ssub.s32 1, %s5
  %s8 = scalar_select 0, %s7, %s5
  $region1: #{upsample_conv_forward.1} parent=0
    #allocation2 [shape = 'u8[262144]{0}', space=vmem, size = 0x40000, scoped, tag = 'output window, operand 0']
    #allocation3 [shape = 's32[2]{0}', space=sflag, size = 0x8, scoped, tag = 'scoped memory for upsample_conv_forward.1']
    %9 = vsyncpa [#allocation3], 0
    %s10 = scalar_lea.sflag [#allocation3], 1
    %11 = vsyncpa %s10, 0
    loop: start=0, step=1, limit=4
    $region2: #{upsample_conv_forward.1} parent=1 // loop_pre_header
      _
    $region3: #{upsample_conv_forward.1} parent=1 // loop_header
      %s13 = sphi 0, %s17
      %p14 = scmp.ge.s32.totalorder %s13, 4
      %s23 = sphi 0, %s25
      %s26 = sphi 0, %s23
      %s27 = sphi 0, %s26
      %s43 = sphi 0, %s27
      %s47 = sphi 0, %s47
      %s49 = sphi 0, %s47
      %s50 = sphi 0, %s49
      %s64 = sphi 0, %s50
      %s68 = sphi 0, %s68
      %s70 = sphi 0, %s68
      %s71 = sphi 0, %s70
      %s85 = sphi 0, %s71
      %s89 = sphi 0, %s89
      %s91 = sphi 0, %s89
      %s92 = sphi 0, %s91
      %s106 = sphi 0, %s92
      %s112 = sphi 0, %s114
      %s115 = sphi 0, %s112
      %s116 = sphi 0, %s115
      %s132 = sphi 0, %s116
    $region4: #{upsample_conv_forward.1} parent=1 // loop_header_branch
      %16 = sbr.rel (%p14) target = $region8
    $region5: #{upsample_conv_forward.1} parent=1 // loop_body
      %s18 = ssub.s32 %s13, 1
      %s19 = ssub.s32 %s13, 2
      %s20 = sadd.s32 %s13, 1
      %s21 = ssub.s32 %s13, %s20
      %p22 = scmp.eq.s32.totalorder %s21, 0
      %s24 = sadd.s32 %s23, 1
      %s25 = scalar_select %p22, %s23, %s24
      %p28 = pneg %p22
      %p29 = scmp.eq.s32.totalorder %s13, 1
      %p30 = por %p28, %p29
      %p31 = scmp.ne.s32.totalorder %s23, %s26
      %p32 = scmp.eq.s32.totalorder %s13, 0
      %p33 = por %p31, %p32
      %p34 = scmp.ne.s32.totalorder %s23, %s26
      %p35 = scmp.eq.s32.totalorder %s18, 1
      %p36 = por %p34, %p35
      %p37 = scmp.ne.s32.totalorder %s26, %s27
      %p38 = scmp.eq.s32.totalorder %s18, 0
      %p39 = por %p37, %p38
      %p40 = scmp.ne.s32.totalorder %s26, %s27
      %p41 = scmp.eq.s32.totalorder %s19, 1
      %p42 = por %p40, %p41
      %p44 = scmp.ne.s32.totalorder %s27, %s43
      %p45 = scmp.eq.s32.totalorder %s19, 0
      %p46 = por %p44, %p45
      %s48 = sadd.s32 %s47, 1
      %p51 = scmp.eq.s32.totalorder %s13, 1
      %p52 = scmp.ne.s32.totalorder %s47, %s49
      %p53 = scmp.eq.s32.totalorder %s13, 0
      %p54 = por %p52, %p53
      %p55 = scmp.ne.s32.totalorder %s47, %s49
      %p56 = scmp.eq.s32.totalorder %s18, 1
      %p57 = por %p55, %p56
      %p58 = scmp.ne.s32.totalorder %s49, %s50
      %p59 = scmp.eq.s32.totalorder %s18, 0
      %p60 = por %p58, %p59
      %p61 = scmp.ne.s32.totalorder %s49, %s50
      %p62 = scmp.eq.s32.totalorder %s19, 1
      %p63 = por %p61, %p62
      %p65 = scmp.ne.s32.totalorder %s50, %s64
      %p66 = scmp.eq.s32.totalorder %s19, 0
      %p67 = por %p65, %p66
      %s69 = sadd.s32 %s68, 1
      %p72 = scmp.eq.s32.totalorder %s13, 1
      %p73 = scmp.ne.s32.totalorder %s68, %s70
      %p74 = scmp.eq.s32.totalorder %s13, 0
      %p75 = por %p73, %p74
      %p76 = scmp.ne.s32.totalorder %s68, %s70
      %p77 = scmp.eq.s32.totalorder %s18, 1
      %p78 = por %p76, %p77
      %p79 = scmp.ne.s32.totalorder %s70, %s71
      %p80 = scmp.eq.s32.totalorder %s18, 0
      %p81 = por %p79, %p80
      %p82 = scmp.ne.s32.totalorder %s70, %s71
      %p83 = scmp.eq.s32.totalorder %s19, 1
      %p84 = por %p82, %p83
      %p86 = scmp.ne.s32.totalorder %s71, %s85
      %p87 = scmp.eq.s32.totalorder %s19, 0
      %p88 = por %p86, %p87
      %s90 = sadd.s32 %s89, 1
      %p93 = scmp.eq.s32.totalorder %s13, 1
      %p94 = scmp.ne.s32.totalorder %s89, %s91
      %p95 = scmp.eq.s32.totalorder %s13, 0
      %p96 = por %p94, %p95
      %p97 = scmp.ne.s32.totalorder %s89, %s91
      %p98 = scmp.eq.s32.totalorder %s18, 1
      %p99 = por %p97, %p98
      %p100 = scmp.ne.s32.totalorder %s91, %s92
      %p101 = scmp.eq.s32.totalorder %s18, 0
      %p102 = por %p100, %p101
      %p103 = scmp.ne.s32.totalorder %s91, %s92
      %p104 = scmp.eq.s32.totalorder %s19, 1
      %p105 = por %p103, %p104
      %p107 = scmp.ne.s32.totalorder %s92, %s106
      %p108 = scmp.eq.s32.totalorder %s19, 0
      %p109 = por %p107, %p108
      %s110 = ssub.s32 %s13, %s20
      %p111 = scmp.eq.s32.totalorder %s110, 0
      %s113 = sadd.s32 %s112, 1
      %s114 = scalar_select %p111, %s112, %s113
      %p117 = pneg %p111
      %p118 = scmp.eq.s32.totalorder %s13, 1
      %p119 = por %p117, %p118
      %p120 = scmp.ne.s32.totalorder %s112, %s115
      %p121 = scmp.eq.s32.totalorder %s13, 0
      %p122 = por %p120, %p121
      %p123 = scmp.ne.s32.totalorder %s112, %s115
      %p124 = scmp.eq.s32.totalorder %s18, 1
      %p125 = por %p123, %p124
      %p126 = scmp.ne.s32.totalorder %s115, %s116
      %p127 = scmp.eq.s32.totalorder %s18, 0
      %p128 = por %p126, %p127
      %p129 = scmp.ne.s32.totalorder %s115, %s116
      %p130 = scmp.eq.s32.totalorder %s19, 1
      %p131 = por %p129, %p130
      %p133 = scmp.ne.s32.totalorder %s116, %s132
      %p134 = scmp.eq.s32.totalorder %s19, 0
      %p135 = por %p133, %p134
      %p136 = scmp.le.s32.totalorder 1, %s13
      %p137 = scmp.lt.s32.totalorder %s13, 3
      %p138 = pnand %p136, %p137
      %p139 = pneg %p138
      // Predicated region
      $region9: #{upsample_conv_forward.1} parent=5 // pred_check
        _
      $region10: #{upsample_conv_forward.1} parent=5 // pred_check_branch
        %141 = sbr.rel (%p138) target = $region12
      $region11: #{upsample_conv_forward.1} parent=5 // pred_region
        %s142 = ssub.s32 %s13, 1
        // Predicated region
        $region13: #{upsample_conv_forward.1} parent=11 // pred_check
          %p143 = pneg %p60
        $region14: #{upsample_conv_forward.1} parent=11 // pred_check_branch
          %145 = sbr.rel (%p143) target = $region16
        $region15: #{upsample_conv_forward.1} parent=11 // pred_region
          _
        $region16: #{upsample_conv_forward.1} parent=11 // pred_fallthru
          _
        // Predicated region
        $region17: #{upsample_conv_forward.1} parent=11 // pred_check
          %p146 = pneg %p81
        $region18: #{upsample_conv_forward.1} parent=11 // pred_check_branch
          %148 = sbr.rel (%p146) target = $region20
        $region19: #{upsample_conv_forward.1} parent=11 // pred_region
          _
        $region20: #{upsample_conv_forward.1} parent=11 // pred_fallthru
          _
        // Predicated region
        $region21: #{upsample_conv_forward.1} parent=11 // pred_check
          %p149 = pneg %p102
        $region22: #{upsample_conv_forward.1} parent=11 // pred_check_branch
          %151 = sbr.rel (%p149) target = $region24
        $region23: #{upsample_conv_forward.1} parent=11 // pred_region
          _
        $region24: #{upsample_conv_forward.1} parent=11 // pred_fallthru
          _
      $region12: #{upsample_conv_forward.1} parent=5 // pred_fallthru
        _
      %p152 = scmp.lt.s32.totalorder %s13, 2
      // Predicated region
      $region25: #{upsample_conv_forward.1} parent=5 // pred_check
        %p153 = pneg %p152
      $region26: #{upsample_conv_forward.1} parent=5 // pred_check_branch
        %155 = sbr.rel (%p153) target = $region28
      $region27: #{upsample_conv_forward.1} parent=5 // pred_region
        // Predicated region
        $region29: #{upsample_conv_forward.1} parent=27 // pred_check
          %p156 = pneg %p33
        $region30: #{upsample_conv_forward.1} parent=27 // pred_check_branch
          %158 = sbr.rel (%p156) target = $region32
        $region31: #{upsample_conv_forward.1} parent=27 // pred_region
          %p159 = scmp.lt.s32.totalorder %s13, 1
          %s160 = scalar_select %p159, %s13, 1
          %s161 = smul.addr %s160, 8
          %s162 = smul.addr %s161, 8
          %s163 = scalar_lea.vmem %s0, %s162
        $region32: #{upsample_conv_forward.1} parent=27 // pred_fallthru
          _
      $region28: #{upsample_conv_forward.1} parent=5 // pred_fallthru
        _
      %p164 = scmp.le.s32.totalorder 1, %s13
      %p165 = scmp.lt.s32.totalorder %s13, 3
      %p166 = pnand %p164, %p165
      %p167 = pneg %p166
      // Predicated region
      $region33: #{upsample_conv_forward.1} parent=5 // pred_check
        _
      $region34: #{upsample_conv_forward.1} parent=5 // pred_check_branch
        %169 = sbr.rel (%p166) target = $region36
      $region35: #{upsample_conv_forward.1} parent=5 // pred_region
        %s170 = ssub.s32 %s13, 1
        %p171 = scmp.lt.s32.totalorder %s18, 1
        %s172 = scalar_select %p171, %s18, 1
        %s173 = smul.addr %s172, 8
        %s174 = smul.addr %s173, 8
        %s175 = scalar_lea.vmem %s0, %s174
        %p176 = pneg %p39
        %p177 = pneg %p36
        %p178 = pneg %p60
        %p179 = pneg %p57
        %p180 = pneg %p81
        %p181 = pneg %p78
        %p182 = pneg %p102
        %p183 = pneg %p99
        %p184 = pneg %p128
        %p185 = pneg %p125
        %s186 = sand.u32 %s115, 1
        %s187 = scalar_lea.sflag [#allocation3], %s186
        %s188 = sand.u32 %s115, 1
        %s189 = smul.addr %s188, 256
        %s190 = scalar_lea.vmem [#allocation2], %s189
        %p191 = scmp.lt.s32.totalorder %s18, 1
        %s192 = scalar_select %p191, %s18, 1
        %s193 = smul.addr %s192, 8
        %s194 = smul.addr %s193, 8
        %s195 = scalar_lea.vmem %s0, %s194
        %v196 = vld [vmem:[%s195] sm:$0xff]
        %v197 = vld [vmem:[%s195 + $0x8] sm:$0xff]
        %v198 = vld [vmem:[%s195 + $0x10] sm:$0xff]
        %v199 = vld [vmem:[%s195 + $0x18] sm:$0xff]
        %v200 = vld [vmem:[%s195 + $0x20] sm:$0xff]
        %v201 = vld [vmem:[%s195 + $0x28] sm:$0xff]
        %v202 = vld [vmem:[%s195 + $0x30] sm:$0xff]
        %v203 = vld [vmem:[%s195 + $0x38] sm:$0xff]
        %v204 = vld [vmem:[%s1] sm:$0xff]
        %v205 = vld [vmem:[%s1 + $0x8] sm:$0xff]
        %vm206 = vcmask 130048
        %v208 = vsel %vm206, %v196, 0
        %v211 = vsel %vm206, %v197, 0
        %v214 = vsel %vm206, %v198, 0
        %v217 = vsel %vm206, %v199, 0
        %v220 = vsel %vm206, %v200, 0
        %v223 = vsel %vm206, %v201, 0
        %v226 = vsel %vm206, %v202, 0
        %v229 = vsel %vm206, %v203, 0
        %231 = vmatpush.msra.mxu0 0.0
        %232 = vmatpush.msra.mxu0 0.0
        %233 = vmatpush.msra.mxu0 0.0
        %234 = vmatpush.msra.mxu0 0.0
        %235 = vmatpush.msra.mxu0 0.0
        %236 = vmatpush.msra.mxu0 0.0
        %237 = vmatpush.msra.mxu0 0.0
        %238 = vmatpush.msra.mxu0 0.0
        %239 = vmatpush.msra.mxu0 0.0
        %240 = vmatpush.msra.mxu0 0.0
        %241 = vmatpush.msra.mxu0 0.0
        %242 = vmatpush.msra.mxu0 0.0
        %243 = vmatpush.msra.mxu0 0.0
        %244 = vmatpush.msra.mxu0 0.0
        %245 = vmatpush.msra.mxu0 %v205
        %246 = vmatpush.msra.mxu0 %v204
        %247 = vmatmul.f32.gmra.mxu0 %v208
        %v248 = vpop.f32.mrf.mxu0
        %v249 = vadd.f32 0.0, %v248
        %250 = vmatmul.f32.gmra.mxu0 %v211
        %v251 = vpop.f32.mrf.mxu0
        %v252 = vadd.f32 0.0, %v251
        %253 = vmatmul.f32.gmra.mxu0 %v214
        %v254 = vpop.f32.mrf.mxu0
        %v255 = vadd.f32 0.0, %v254
        %256 = vmatmul.f32.gmra.mxu0 %v217
        %v257 = vpop.f32.mrf.mxu0
        %v258 = vadd.f32 0.0, %v257
        %259 = vmatmul.f32.gmra.mxu0 %v220
        %v260 = vpop.f32.mrf.mxu0
        %v261 = vadd.f32 0.0, %v260
        %262 = vmatmul.f32.gmra.mxu0 %v223
        %v263 = vpop.f32.mrf.mxu0
        %v264 = vadd.f32 0.0, %v263
        %265 = vmatmul.f32.gmra.mxu0 %v226
        %v266 = vpop.f32.mrf.mxu0
        %v267 = vadd.f32 0.0, %v266
        %268 = vmatmul.f32.gmra.mxu0 %v229
        %v269 = vpop.f32.mrf.mxu0
        %v270 = vadd.f32 0.0, %v269
        %271 = vdwg.mxu0
        %v272 = vld [vmem:[%s3] sm:$0xff]
        %v273 = vld [vmem:[%s3 + $0x8] sm:$0xff]
        %v274 = vld [vmem:[%s3 + $0x10] sm:$0xff]
        %v275 = vld [vmem:[%s3 + $0x18] sm:$0xff]
        %v276 = vld [vmem:[%s3 + $0x20] sm:$0xff]
        %v277 = vld [vmem:[%s3 + $0x28] sm:$0xff]
        %v278 = vld [vmem:[%s3 + $0x30] sm:$0xff]
        %v279 = vld [vmem:[%s3 + $0x38] sm:$0xff]
        %v280 = vld [vmem:[%s3 + $0x40] sm:$0xff]
        %v281 = vld [vmem:[%s3 + $0x48] sm:$0xff]
        %v282 = vld [vmem:[%s3 + $0x50] sm:$0xff]
        %v283 = vld [vmem:[%s3 + $0x58] sm:$0xff]
        %v284 = vld [vmem:[%s3 + $0x60] sm:$0xff]
        %v285 = vld [vmem:[%s3 + $0x68] sm:$0xff]
        %v286 = vld [vmem:[%s3 + $0x70] sm:$0xff]
        %v287 = vld [vmem:[%s3 + $0x78] sm:$0xff]
        %v288 = vld [vmem:[%s3 + $0x80] sm:$0xff]
        %v289 = vld [vmem:[%s3 + $0x88] sm:$0xff]
        %v290 = vld [vmem:[%s3 + $0x90] sm:$0xff]
        %v291 = vld [vmem:[%s3 + $0x98] sm:$0xff]
        %v292 = vld [vmem:[%s3 + $0xa0] sm:$0xff]
        %v293 = vld [vmem:[%s3 + $0xa8] sm:$0xff]
        %v294 = vld [vmem:[%s3 + $0xb0] sm:$0xff]
        %v295 = vld [vmem:[%s3 + $0xb8] sm:$0xff]
        %v296 = vld [vmem:[%s3 + $0xc0] sm:$0xff]
        %v297 = vld [vmem:[%s3 + $0xc8] sm:$0xff]
        %v298 = vld [vmem:[%s3 + $0xd0] sm:$0xff]
        %v299 = vld [vmem:[%s3 + $0xd8] sm:$0xff]
        %v300 = vld [vmem:[%s3 + $0xe0] sm:$0xff]
        %v301 = vld [vmem:[%s3 + $0xe8] sm:$0xff]
        %v302 = vld [vmem:[%s3 + $0xf0] sm:$0xff]
        %v303 = vld [vmem:[%s3 + $0xf8] sm:$0xff]
        %v304 = vld [vmem:[%s2] sm:$0xff]
        %v305 = vld [vmem:[%s2 + $0x8] sm:$0xff]
        %v306 = vld [vmem:[%s2 + $0x10] sm:$0xff]
        %v307 = vld [vmem:[%s2 + $0x18] sm:$0xff]
        %v308 = vld [vmem:[%s2 + $0x20] sm:$0xff]
        %v309 = vld [vmem:[%s2 + $0x28] sm:$0xff]
        %v310 = vld [vmem:[%s2 + $0x30] sm:$0xff]
        %v311 = vld [vmem:[%s2 + $0x38] sm:$0xff]
        %v312 = vld [vmem:[%s2 + $0x40] sm:$0xff]
        %v313 = vld [vmem:[%s2 + $0x48] sm:$0xff]
        %v314 = vld [vmem:[%s2 + $0x50] sm:$0xff]
        %v315 = vld [vmem:[%s2 + $0x58] sm:$0xff]
        %v316 = vld [vmem:[%s2 + $0x60] sm:$0xff]
        %v317 = vld [vmem:[%s2 + $0x68] sm:$0xff]
        %v318 = vld [vmem:[%s2 + $0x70] sm:$0xff]
        %v319 = vld [vmem:[%s2 + $0x78] sm:$0xff]
        %v320 = vld [vmem:[%s2 + $0x80] sm:$0xff]
        %v321 = vld [vmem:[%s2 + $0x88] sm:$0xff]
        %v322 = vld [vmem:[%s2 + $0x90] sm:$0xff]
        %v323 = vld [vmem:[%s2 + $0x98] sm:$0xff]
        %v324 = vld [vmem:[%s2 + $0xa0] sm:$0xff]
        %v325 = vld [vmem:[%s2 + $0xa8] sm:$0xff]
        %v326 = vld [vmem:[%s2 + $0xb0] sm:$0xff]
        %v327 = vld [vmem:[%s2 + $0xb8] sm:$0xff]
        %v328 = vld [vmem:[%s2 + $0xc0] sm:$0xff]
        %v329 = vld [vmem:[%s2 + $0xc8] sm:$0xff]
        %v330 = vld [vmem:[%s2 + $0xd0] sm:$0xff]
        %v331 = vld [vmem:[%s2 + $0xd8] sm:$0xff]
        %v332 = vld [vmem:[%s2 + $0xe0] sm:$0xff]
        %v333 = vld [vmem:[%s2 + $0xe8] sm:$0xff]
        %v334 = vld [vmem:[%s2 + $0xf0] sm:$0xff]
        %v335 = vld [vmem:[%s2 + $0xf8] sm:$0xff]
        %vm336 = vcmask 523264
        %v338 = vsel %vm336, %v304, 0
        %v341 = vsel %vm336, %v305, 0
        %v344 = vsel %vm336, %v306, 0
        %v347 = vsel %vm336, %v307, 0
        %v350 = vsel %vm336, %v308, 0
        %v353 = vsel %vm336, %v309, 0
        %v356 = vsel %vm336, %v310, 0
        %v359 = vsel %vm336, %v311, 0
        %v362 = vsel %vm336, %v312, 0
        %v365 = vsel %vm336, %v313, 0
        %v368 = vsel %vm336, %v314, 0
        %v371 = vsel %vm336, %v315, 0
        %v374 = vsel %vm336, %v316, 0
        %v377 = vsel %vm336, %v317, 0
        %v380 = vsel %vm336, %v318, 0
        %v383 = vsel %vm336, %v319, 0
        %v386 = vsel %vm336, %v320, 0
        %v389 = vsel %vm336, %v321, 0
        %v392 = vsel %vm336, %v322, 0
        %v395 = vsel %vm336, %v323, 0
        %v398 = vsel %vm336, %v324, 0
        %v401 = vsel %vm336, %v325, 0
        %v404 = vsel %vm336, %v326, 0
        %v407 = vsel %vm336, %v327, 0
        %v410 = vsel %vm336, %v328, 0
        %v413 = vsel %vm336, %v329, 0
        %v416 = vsel %vm336, %v330, 0
        %v419 = vsel %vm336, %v331, 0
        %v422 = vsel %vm336, %v332, 0
        %v425 = vsel %vm336, %v333, 0
        %v428 = vsel %vm336, %v334, 0
        %v431 = vsel %vm336, %v335, 0
        %433 = vmatpush.msra.mxu0 0.0
        %434 = vmatpush.msra.mxu0 0.0
        %435 = vmatpush.msra.mxu0 0.0
        %436 = vmatpush.msra.mxu0 0.0
        %437 = vmatpush.msra.mxu0 0.0
        %438 = vmatpush.msra.mxu0 0.0
        %439 = vmatpush.msra.mxu0 0.0
        %440 = vmatpush.msra.mxu0 0.0
        %441 = vmatpush.msra.mxu0 %v270
        %442 = vmatpush.msra.mxu0 %v267
        %443 = vmatpush.msra.mxu0 %v264
        %444 = vmatpush.msra.mxu0 %v261
        %445 = vmatpush.msra.mxu0 %v258
        %446 = vmatpush.msra.mxu0 %v255
        %447 = vmatpush.msra.mxu0 %v252
        %448 = vmatpush.msra.mxu0 %v249
        %449 = vmatmul.f32.gmra.mxu0 %v338
        %v450 = vpop.f32.mrf.mxu0
        %v451 = vadd.f32 0.0, %v450
        %452 = vmatmul.f32.gmra.mxu0 %v341
        %v453 = vpop.f32.mrf.mxu0
        %v454 = vadd.f32 0.0, %v453
        %455 = vmatmul.f32.gmra.mxu0 %v344
        %v456 = vpop.f32.mrf.mxu0
        %v457 = vadd.f32 0.0, %v456
        %458 = vmatmul.f32.gmra.mxu0 %v347
        %v459 = vpop.f32.mrf.mxu0
        %v460 = vadd.f32 0.0, %v459
        %461 = vmatmul.f32.gmra.mxu0 %v350
        %v462 = vpop.f32.mrf.mxu0
        %v463 = vadd.f32 0.0, %v462
        %464 = vmatmul.f32.gmra.mxu0 %v353
        %v465 = vpop.f32.mrf.mxu0
        %v466 = vadd.f32 0.0, %v465
        %467 = vmatmul.f32.gmra.mxu0 %v356
        %v468 = vpop.f32.mrf.mxu0
        %v469 = vadd.f32 0.0, %v468
        %470 = vmatmul.f32.gmra.mxu0 %v359
        %v471 = vpop.f32.mrf.mxu0
        %v472 = vadd.f32 0.0, %v471
        %473 = vmatmul.f32.gmra.mxu0 %v362
        %v474 = vpop.f32.mrf.mxu0
        %v475 = vadd.f32 0.0, %v474
        %476 = vmatmul.f32.gmra.mxu0 %v365
        %v477 = vpop.f32.mrf.mxu0
        %v478 = vadd.f32 0.0, %v477
        %479 = vmatmul.f32.gmra.mxu0 %v368
        %v480 = vpop.f32.mrf.mxu0
        %v481 = vadd.f32 0.0, %v480
        %482 = vmatmul.f32.gmra.mxu0 %v371
        %v483 = vpop.f32.mrf.mxu0
        %v484 = vadd.f32 0.0, %v483
        %485 = vmatmul.f32.gmra.mxu0 %v374
        %v486 = vpop.f32.mrf.mxu0
        %v487 = vadd.f32 0.0, %v486
        %488 = vmatmul.f32.gmra.mxu0 %v377
        %v489 = vpop.f32.mrf.mxu0
        %v490 = vadd.f32 0.0, %v489
        %491 = vmatmul.f32.gmra.mxu0 %v380
        %v492 = vpop.f32.mrf.mxu0
        %v493 = vadd.f32 0.0, %v492
        %494 = vmatmul.f32.gmra.mxu0 %v383
        %v495 = vpop.f32.mrf.mxu0
        %v496 = vadd.f32 0.0, %v495
        %497 = vmatmul.f32.gmra.mxu0 %v386
        %v498 = vpop.f32.mrf.mxu0
        %v499 = vadd.f32 0.0, %v498
        %500 = vmatmul.f32.gmra.mxu0 %v389
        %v501 = vpop.f32.mrf.mxu0
        %v502 = vadd.f32 0.0, %v501
        %503 = vmatmul.f32.gmra.mxu0 %v392
        %v504 = vpop.f32.mrf.mxu0
        %v505 = vadd.f32 0.0, %v504
        %506 = vmatmul.f32.gmra.mxu0 %v395
        %v507 = vpop.f32.mrf.mxu0
        %v508 = vadd.f32 0.0, %v507
        %509 = vmatmul.f32.gmra.mxu0 %v398
        %v510 = vpop.f32.mrf.mxu0
        %v511 = vadd.f32 0.0, %v510
        %512 = vmatmul.f32.gmra.mxu0 %v401
        %v513 = vpop.f32.mrf.mxu0
        %v514 = vadd.f32 0.0, %v513
        %515 = vmatmul.f32.gmra.mxu0 %v404
        %v516 = vpop.f32.mrf.mxu0
        %v517 = vadd.f32 0.0, %v516
        %518 = vmatmul.f32.gmra.mxu0 %v407
        %v519 = vpop.f32.mrf.mxu0
        %v520 = vadd.f32 0.0, %v519
        %521 = vmatmul.f32.gmra.mxu0 %v410
        %v522 = vpop.f32.mrf.mxu0
        %v523 = vadd.f32 0.0, %v522
        %524 = vmatmul.f32.gmra.mxu0 %v413
        %v525 = vpop.f32.mrf.mxu0
        %v526 = vadd.f32 0.0, %v525
        %527 = vmatmul.f32.gmra.mxu0 %v416
        %v528 = vpop.f32.mrf.mxu0
        %v529 = vadd.f32 0.0, %v528
        %530 = vmatmul.f32.gmra.mxu0 %v419
        %v531 = vpop.f32.mrf.mxu0
        %v532 = vadd.f32 0.0, %v531
        %533 = vmatmul.f32.gmra.mxu0 %v422
        %v534 = vpop.f32.mrf.mxu0
        %v535 = vadd.f32 0.0, %v534
        %536 = vmatmul.f32.gmra.mxu0 %v425
        %v537 = vpop.f32.mrf.mxu0
        %v538 = vadd.f32 0.0, %v537
        %539 = vmatmul.f32.gmra.mxu0 %v428
        %v540 = vpop.f32.mrf.mxu0
        %v541 = vadd.f32 0.0, %v540
        %542 = vmatmul.f32.gmra.mxu0 %v431
        %v543 = vpop.f32.mrf.mxu0
        %v544 = vadd.f32 0.0, %v543
        %545 = vdwg.mxu0
        %547 = vset.pattern.permute.xlu0 0
        %548 = vperm.xlu0 %547, %v272
        %v549 = vpop.permute.xlu0 %548
        %552 = vset.pattern.permute.xlu0 0
        %553 = vperm.xlu0 %552, %v273
        %v554 = vpop.permute.xlu0 %553
        %557 = vset.pattern.permute.xlu0 0
        %558 = vperm.xlu0 %557, %v274
        %v559 = vpop.permute.xlu0 %558
        %562 = vset.pattern.permute.xlu0 0
        %563 = vperm.xlu0 %562, %v275
        %v564 = vpop.permute.xlu0 %563
        %567 = vset.pattern.permute.xlu0 0
        %568 = vperm.xlu0 %567, %v276
        %v569 = vpop.permute.xlu0 %568
        %572 = vset.pattern.permute.xlu0 0
        %573 = vperm.xlu0 %572, %v277
        %v574 = vpop.permute.xlu0 %573
        %577 = vset.pattern.permute.xlu0 0
        %578 = vperm.xlu0 %577, %v278
        %v579 = vpop.permute.xlu0 %578
        %582 = vset.pattern.permute.xlu0 0
        %583 = vperm.xlu0 %582, %v279
        %v584 = vpop.permute.xlu0 %583
        %587 = vset.pattern.permute.xlu0 0
        %588 = vperm.xlu0 %587, %v280
        %v589 = vpop.permute.xlu0 %588
        %592 = vset.pattern.permute.xlu0 0
        %593 = vperm.xlu0 %592, %v281
        %v594 = vpop.permute.xlu0 %593
        %597 = vset.pattern.permute.xlu0 0
        %598 = vperm.xlu0 %597, %v282
        %v599 = vpop.permute.xlu0 %598
        %602 = vset.pattern.permute.xlu0 0
        %603 = vperm.xlu0 %602, %v283
        %v604 = vpop.permute.xlu0 %603
        %607 = vset.pattern.permute.xlu0 0
        %608 = vperm.xlu0 %607, %v284
        %v609 = vpop.permute.xlu0 %608
        %612 = vset.pattern.permute.xlu0 0
        %613 = vperm.xlu0 %612, %v285
        %v614 = vpop.permute.xlu0 %613
        %617 = vset.pattern.permute.xlu0 0
        %618 = vperm.xlu0 %617, %v286
        %v619 = vpop.permute.xlu0 %618
        %622 = vset.pattern.permute.xlu0 0
        %623 = vperm.xlu0 %622, %v287
        %v624 = vpop.permute.xlu0 %623
        %627 = vset.pattern.permute.xlu0 0
        %628 = vperm.xlu0 %627, %v288
        %v629 = vpop.permute.xlu0 %628
        %632 = vset.pattern.permute.xlu0 0
        %633 = vperm.xlu0 %632, %v289
        %v634 = vpop.permute.xlu0 %633
        %637 = vset.pattern.permute.xlu0 0
        %638 = vperm.xlu0 %637, %v290
        %v639 = vpop.permute.xlu0 %638
        %642 = vset.pattern.permute.xlu0 0
        %643 = vperm.xlu0 %642, %v291
        %v644 = vpop.permute.xlu0 %643
        %647 = vset.pattern.permute.xlu0 0
        %648 = vperm.xlu0 %647, %v292
        %v649 = vpop.permute.xlu0 %648
        %652 = vset.pattern.permute.xlu0 0
        %653 = vperm.xlu0 %652, %v293
        %v654 = vpop.permute.xlu0 %653
        %657 = vset.pattern.permute.xlu0 0
        %658 = vperm.xlu0 %657, %v294
        %v659 = vpop.permute.xlu0 %658
        %662 = vset.pattern.permute.xlu0 0
        %663 = vperm.xlu0 %662, %v295
        %v664 = vpop.permute.xlu0 %663
        %667 = vset.pattern.permute.xlu0 0
        %668 = vperm.xlu0 %667, %v296
        %v669 = vpop.permute.xlu0 %668
        %672 = vset.pattern.permute.xlu0 0
        %673 = vperm.xlu0 %672, %v297
        %v674 = vpop.permute.xlu0 %673
        %677 = vset.pattern.permute.xlu0 0
        %678 = vperm.xlu0 %677, %v298
        %v679 = vpop.permute.xlu0 %678
        %682 = vset.pattern.permute.xlu0 0
        %683 = vperm.xlu0 %682, %v299
        %v684 = vpop.permute.xlu0 %683
        %687 = vset.pattern.permute.xlu0 0
        %688 = vperm.xlu0 %687, %v300
        %v689 = vpop.permute.xlu0 %688
        %692 = vset.pattern.permute.xlu0 0
        %693 = vperm.xlu0 %692, %v301
        %v694 = vpop.permute.xlu0 %693
        %697 = vset.pattern.permute.xlu0 0
        %698 = vperm.xlu0 %697, %v302
        %v699 = vpop.permute.xlu0 %698
        %702 = vset.pattern.permute.xlu0 0
        %703 = vperm.xlu0 %702, %v303
        %v704 = vpop.permute.xlu0 %703
        %v706 = vadd.f32 %v549, %v451
        %v707 = vadd.f32 %v554, %v454
        %v708 = vadd.f32 %v559, %v457
        %v709 = vadd.f32 %v564, %v460
        %v710 = vadd.f32 %v569, %v463
        %v711 = vadd.f32 %v574, %v466
        %v712 = vadd.f32 %v579, %v469
        %v713 = vadd.f32 %v584, %v472
        %v714 = vadd.f32 %v589, %v475
        %v715 = vadd.f32 %v594, %v478
        %v716 = vadd.f32 %v599, %v481
        %v717 = vadd.f32 %v604, %v484
        %v718 = vadd.f32 %v609, %v487
        %v719 = vadd.f32 %v614, %v490
        %v720 = vadd.f32 %v619, %v493
        %v721 = vadd.f32 %v624, %v496
        %v722 = vadd.f32 %v629, %v499
        %v723 = vadd.f32 %v634, %v502
        %v724 = vadd.f32 %v639, %v505
        %v725 = vadd.f32 %v644, %v508
        %v726 = vadd.f32 %v649, %v511
        %v727 = vadd.f32 %v654, %v514
        %v728 = vadd.f32 %v659, %v517
        %v729 = vadd.f32 %v664, %v520
        %v730 = vadd.f32 %v669, %v523
        %v731 = vadd.f32 %v674, %v526
        %v732 = vadd.f32 %v679, %v529
        %v733 = vadd.f32 %v684, %v532
        %v734 = vadd.f32 %v689, %v535
        %v735 = vadd.f32 %v694, %v538
        %v736 = vadd.f32 %v699, %v541
        %v737 = vadd.f32 %v704, %v544
        %vm738 = vcmask 261120
        %739 = vst.msk [vmem:[%s190] sm:$0xff] %vm738, %v706
        %740 = vst.msk [vmem:[%s190 + $0x8] sm:$0xff] %vm738, %v707
        %741 = vst.msk [vmem:[%s190 + $0x10] sm:$0xff] %vm738, %v708
        %742 = vst.msk [vmem:[%s190 + $0x18] sm:$0xff] %vm738, %v709
        %743 = vst.msk [vmem:[%s190 + $0x20] sm:$0xff] %vm738, %v710
        %744 = vst.msk [vmem:[%s190 + $0x28] sm:$0xff] %vm738, %v711
        %745 = vst.msk [vmem:[%s190 + $0x30] sm:$0xff] %vm738, %v712
        %746 = vst.msk [vmem:[%s190 + $0x38] sm:$0xff] %vm738, %v713
        %747 = vst.msk [vmem:[%s190 + $0x40] sm:$0xff] %vm738, %v714
        %748 = vst.msk [vmem:[%s190 + $0x48] sm:$0xff] %vm738, %v715
        %749 = vst.msk [vmem:[%s190 + $0x50] sm:$0xff] %vm738, %v716
        %750 = vst.msk [vmem:[%s190 + $0x58] sm:$0xff] %vm738, %v717
        %751 = vst.msk [vmem:[%s190 + $0x60] sm:$0xff] %vm738, %v718
        %752 = vst.msk [vmem:[%s190 + $0x68] sm:$0xff] %vm738, %v719
        %753 = vst.msk [vmem:[%s190 + $0x70] sm:$0xff] %vm738, %v720
        %754 = vst.msk [vmem:[%s190 + $0x78] sm:$0xff] %vm738, %v721
        %755 = vst.msk [vmem:[%s190 + $0x80] sm:$0xff] %vm738, %v722
        %756 = vst.msk [vmem:[%s190 + $0x88] sm:$0xff] %vm738, %v723
        %757 = vst.msk [vmem:[%s190 + $0x90] sm:$0xff] %vm738, %v724
        %758 = vst.msk [vmem:[%s190 + $0x98] sm:$0xff] %vm738, %v725
        %759 = vst.msk [vmem:[%s190 + $0xa0] sm:$0xff] %vm738, %v726
        %760 = vst.msk [vmem:[%s190 + $0xa8] sm:$0xff] %vm738, %v727
        %761 = vst.msk [vmem:[%s190 + $0xb0] sm:$0xff] %vm738, %v728
        %762 = vst.msk [vmem:[%s190 + $0xb8] sm:$0xff] %vm738, %v729
        %763 = vst.msk [vmem:[%s190 + $0xc0] sm:$0xff] %vm738, %v730
        %764 = vst.msk [vmem:[%s190 + $0xc8] sm:$0xff] %vm738, %v731
        %765 = vst.msk [vmem:[%s190 + $0xd0] sm:$0xff] %vm738, %v732
        %766 = vst.msk [vmem:[%s190 + $0xd8] sm:$0xff] %vm738, %v733
        %767 = vst.msk [vmem:[%s190 + $0xe0] sm:$0xff] %vm738, %v734
        %768 = vst.msk [vmem:[%s190 + $0xe8] sm:$0xff] %vm738, %v735
        %769 = vst.msk [vmem:[%s190 + $0xf0] sm:$0xff] %vm738, %v736
        %770 = vst.msk [vmem:[%s190 + $0xf8] sm:$0xff] %vm738, %v737
        %s771 = scalar_lea.vmem %s1, 16
        %v772 = vld [vmem:[%s771] sm:$0xff]
        %v773 = vld [vmem:[%s771 + $0x8] sm:$0xff]
        %774 = vmatpush.msra.mxu0 0.0
        %775 = vmatpush.msra.mxu0 0.0
        %776 = vmatpush.msra.mxu0 0.0
        %777 = vmatpush.msra.mxu0 0.0
        %778 = vmatpush.msra.mxu0 0.0
        %779 = vmatpush.msra.mxu0 0.0
        %780 = vmatpush.msra.mxu0 0.0
        %781 = vmatpush.msra.mxu0 0.0
        %782 = vmatpush.msra.mxu0 0.0
        %783 = vmatpush.msra.mxu0 0.0
        %784 = vmatpush.msra.mxu0 0.0
        %785 = vmatpush.msra.mxu0 0.0
        %786 = vmatpush.msra.mxu0 0.0
        %787 = vmatpush.msra.mxu0 0.0
        %788 = vmatpush.msra.mxu0 %v773
        %789 = vmatpush.msra.mxu0 %v772
        %790 = vmatmul.f32.gmra.mxu0 %v208
        %v791 = vpop.f32.mrf.mxu0
        %v792 = vadd.f32 0.0, %v791
        %793 = vmatmul.f32.gmra.mxu0 %v211
        %v794 = vpop.f32.mrf.mxu0
        %v795 = vadd.f32 0.0, %v794
        %796 = vmatmul.f32.gmra.mxu0 %v214
        %v797 = vpop.f32.mrf.mxu0
        %v798 = vadd.f32 0.0, %v797
        %799 = vmatmul.f32.gmra.mxu0 %v217
        %v800 = vpop.f32.mrf.mxu0
        %v801 = vadd.f32 0.0, %v800
        %802 = vmatmul.f32.gmra.mxu0 %v220
        %v803 = vpop.f32.mrf.mxu0
        %v804 = vadd.f32 0.0, %v803
        %805 = vmatmul.f32.gmra.mxu0 %v223
        %v806 = vpop.f32.mrf.mxu0
        %v807 = vadd.f32 0.0, %v806
        %808 = vmatmul.f32.gmra.mxu0 %v226
        %v809 = vpop.f32.mrf.mxu0
        %v810 = vadd.f32 0.0, %v809
        %811 = vmatmul.f32.gmra.mxu0 %v229
        %v812 = vpop.f32.mrf.mxu0
        %v813 = vadd.f32 0.0, %v812
        %814 = vdwg.mxu0
        %v815 = vld [vmem:[%s190] sm:$0xff]
        %v816 = vld [vmem:[%s190 + $0x8] sm:$0xff]
        %v817 = vld [vmem:[%s190 + $0x10] sm:$0xff]
        %v818 = vld [vmem:[%s190 + $0x18] sm:$0xff]
        %v819 = vld [vmem:[%s190 + $0x20] sm:$0xff]
        %v820 = vld [vmem:[%s190 + $0x28] sm:$0xff]
        %v821 = vld [vmem:[%s190 + $0x30] sm:$0xff]
        %v822 = vld [vmem:[%s190 + $0x38] sm:$0xff]
        %v823 = vld [vmem:[%s190 + $0x40] sm:$0xff]
        %v824 = vld [vmem:[%s190 + $0x48] sm:$0xff]
        %v825 = vld [vmem:[%s190 + $0x50] sm:$0xff]
        %v826 = vld [vmem:[%s190 + $0x58] sm:$0xff]
        %v827 = vld [vmem:[%s190 + $0x60] sm:$0xff]
        %v828 = vld [vmem:[%s190 + $0x68] sm:$0xff]
        %v829 = vld [vmem:[%s190 + $0x70] sm:$0xff]
        %v830 = vld [vmem:[%s190 + $0x78] sm:$0xff]
        %v831 = vld [vmem:[%s190 + $0x80] sm:$0xff]
        %v832 = vld [vmem:[%s190 + $0x88] sm:$0xff]
        %v833 = vld [vmem:[%s190 + $0x90] sm:$0xff]
        %v834 = vld [vmem:[%s190 + $0x98] sm:$0xff]
        %v835 = vld [vmem:[%s190 + $0xa0] sm:$0xff]
        %v836 = vld [vmem:[%s190 + $0xa8] sm:$0xff]
        %v837 = vld [vmem:[%s190 + $0xb0] sm:$0xff]
        %v838 = vld [vmem:[%s190 + $0xb8] sm:$0xff]
        %v839 = vld [vmem:[%s190 + $0xc0] sm:$0xff]
        %v840 = vld [vmem:[%s190 + $0xc8] sm:$0xff]
        %v841 = vld [vmem:[%s190 + $0xd0] sm:$0xff]
        %v842 = vld [vmem:[%s190 + $0xd8] sm:$0xff]
        %v843 = vld [vmem:[%s190 + $0xe0] sm:$0xff]
        %v844 = vld [vmem:[%s190 + $0xe8] sm:$0xff]
        %v845 = vld [vmem:[%s190 + $0xf0] sm:$0xff]
        %v846 = vld [vmem:[%s190 + $0xf8] sm:$0xff]
        %s847 = scalar_lea.vmem %s2, 256
        %v848 = vld [vmem:[%s847] sm:$0xff]
        %v849 = vld [vmem:[%s847 + $0x8] sm:$0xff]
        %v850 = vld [vmem:[%s847 + $0x10] sm:$0xff]
        %v851 = vld [vmem:[%s847 + $0x18] sm:$0xff]
        %v852 = vld [vmem:[%s847 + $0x20] sm:$0xff]
        %v853 = vld [vmem:[%s847 + $0x28] sm:$0xff]
        %v854 = vld [vmem:[%s847 + $0x30] sm:$0xff]
        %v855 = vld [vmem:[%s847 + $0x38] sm:$0xff]
        %v856 = vld [vmem:[%s847 + $0x40] sm:$0xff]
        %v857 = vld [vmem:[%s847 + $0x48] sm:$0xff]
        %v858 = vld [vmem:[%s847 + $0x50] sm:$0xff]
        %v859 = vld [vmem:[%s847 + $0x58] sm:$0xff]
        %v860 = vld [vmem:[%s847 + $0x60] sm:$0xff]
        %v861 = vld [vmem:[%s847 + $0x68] sm:$0xff]
        %v862 = vld [vmem:[%s847 + $0x70] sm:$0xff]
        %v863 = vld [vmem:[%s847 + $0x78] sm:$0xff]
        %v864 = vld [vmem:[%s847 + $0x80] sm:$0xff]
        %v865 = vld [vmem:[%s847 + $0x88] sm:$0xff]
        %v866 = vld [vmem:[%s847 + $0x90] sm:$0xff]
        %v867 = vld [vmem:[%s847 + $0x98] sm:$0xff]
        %v868 = vld [vmem:[%s847 + $0xa0] sm:$0xff]
        %v869 = vld [vmem:[%s847 + $0xa8] sm:$0xff]
        %v870 = vld [vmem:[%s847 + $0xb0] sm:$0xff]
        %v871 = vld [vmem:[%s847 + $0xb8] sm:$0xff]
        %v872 = vld [vmem:[%s847 + $0xc0] sm:$0xff]
        %v873 = vld [vmem:[%s847 + $0xc8] sm:$0xff]
        %v874 = vld [vmem:[%s847 + $0xd0] sm:$0xff]
        %v875 = vld [vmem:[%s847 + $0xd8] sm:$0xff]
        %v876 = vld [vmem:[%s847 + $0xe0] sm:$0xff]
        %v877 = vld [vmem:[%s847 + $0xe8] sm:$0xff]
        %v878 = vld [vmem:[%s847 + $0xf0] sm:$0xff]
        %v879 = vld [vmem:[%s847 + $0xf8] sm:$0xff]
        %v881 = vsel %vm336, %v848, 0
        %v884 = vsel %vm336, %v849, 0
        %v887 = vsel %vm336, %v850, 0
        %v890 = vsel %vm336, %v851, 0
        %v893 = vsel %vm336, %v852, 0
        %v896 = vsel %vm336, %v853, 0
        %v899 = vsel %vm336, %v854, 0
        %v902 = vsel %vm336, %v855, 0
        %v905 = vsel %vm336, %v856, 0
        %v908 = vsel %vm336, %v857, 0
        %v911 = vsel %vm336, %v858, 0
        %v914 = vsel %vm336, %v859, 0
        %v917 = vsel %vm336, %v860, 0
        %v920 = vsel %vm336, %v861, 0
        %v923 = vsel %vm336, %v862, 0
        %v926 = vsel %vm336, %v863, 0
        %v929 = vsel %vm336, %v864, 0
        %v932 = vsel %vm336, %v865, 0
        %v935 = vsel %vm336, %v866, 0
        %v938 = vsel %vm336, %v867, 0
        %v941 = vsel %vm336, %v868, 0
        %v944 = vsel %vm336, %v869, 0
        %v947 = vsel %vm336, %v870, 0
        %v950 = vsel %vm336, %v871, 0
        %v953 = vsel %vm336, %v872, 0
        %v956 = vsel %vm336, %v873, 0
        %v959 = vsel %vm336, %v874, 0
        %v962 = vsel %vm336, %v875, 0
        %v965 = vsel %vm336, %v876, 0
        %v968 = vsel %vm336, %v877, 0
        %v971 = vsel %vm336, %v878, 0
        %v974 = vsel %vm336, %v879, 0
        %976 = vmatpush.msra.mxu0 0.0
        %977 = vmatpush.msra.mxu0 0.0
        %978 = vmatpush.msra.mxu0 0.0
        %979 = vmatpush.msra.mxu0 0.0
        %980 = vmatpush.msra.mxu0 0.0
        %981 = vmatpush.msra.mxu0 0.0
        %982 = vmatpush.msra.mxu0 0.0
        %983 = vmatpush.msra.mxu0 0.0
        %984 = vmatpush.msra.mxu0 %v813
        %985 = vmatpush.msra.mxu0 %v810
        %986 = vmatpush.msra.mxu0 %v807
        %987 = vmatpush.msra.mxu0 %v804
        %988 = vmatpush.msra.mxu0 %v801
        %989 = vmatpush.msra.mxu0 %v798
        %990 = vmatpush.msra.mxu0 %v795
        %991 = vmatpush.msra.mxu0 %v792
        %992 = vmatmul.f32.gmra.mxu0 %v881
        %v993 = vpop.f32.mrf.mxu0
        %v994 = vadd.f32 0.0, %v993
        %995 = vmatmul.f32.gmra.mxu0 %v884
        %v996 = vpop.f32.mrf.mxu0
        %v997 = vadd.f32 0.0, %v996
        %998 = vmatmul.f32.gmra.mxu0 %v887
        %v999 = vpop.f32.mrf.mxu0
        %v1000 = vadd.f32 0.0, %v999
        %1001 = vmatmul.f32.gmra.mxu0 %v890
        %v1002 = vpop.f32.mrf.mxu0
        %v1003 = vadd.f32 0.0, %v1002
        %1004 = vmatmul.f32.gmra.mxu0 %v893
        %v1005 = vpop.f32.mrf.mxu0
        %v1006 = vadd.f32 0.0, %v1005
        %1007 = vmatmul.f32.gmra.mxu0 %v896
        %v1008 = vpop.f32.mrf.mxu0
        %v1009 = vadd.f32 0.0, %v1008
        %1010 = vmatmul.f32.gmra.mxu0 %v899
        %v1011 = vpop.f32.mrf.mxu0
        %v1012 = vadd.f32 0.0, %v1011
        %1013 = vmatmul.f32.gmra.mxu0 %v902
        %v1014 = vpop.f32.mrf.mxu0
        %v1015 = vadd.f32 0.0, %v1014
        %1016 = vmatmul.f32.gmra.mxu0 %v905
        %v1017 = vpop.f32.mrf.mxu0
        %v1018 = vadd.f32 0.0, %v1017
        %1019 = vmatmul.f32.gmra.mxu0 %v908
        %v1020 = vpop.f32.mrf.mxu0
        %v1021 = vadd.f32 0.0, %v1020
        %1022 = vmatmul.f32.gmra.mxu0 %v911
        %v1023 = vpop.f32.mrf.mxu0
        %v1024 = vadd.f32 0.0, %v1023
        %1025 = vmatmul.f32.gmra.mxu0 %v914
        %v1026 = vpop.f32.mrf.mxu0
        %v1027 = vadd.f32 0.0, %v1026
        %1028 = vmatmul.f32.gmra.mxu0 %v917
        %v1029 = vpop.f32.mrf.mxu0
        %v1030 = vadd.f32 0.0, %v1029
        %1031 = vmatmul.f32.gmra.mxu0 %v920
        %v1032 = vpop.f32.mrf.mxu0
        %v1033 = vadd.f32 0.0, %v1032
        %1034 = vmatmul.f32.gmra.mxu0 %v923
        %v1035 = vpop.f32.mrf.mxu0
        %v1036 = vadd.f32 0.0, %v1035
        %1037 = vmatmul.f32.gmra.mxu0 %v926
        %v1038 = vpop.f32.mrf.mxu0
        %v1039 = vadd.f32 0.0, %v1038
        %1040 = vmatmul.f32.gmra.mxu0 %v929
        %v1041 = vpop.f32.mrf.mxu0
        %v1042 = vadd.f32 0.0, %v1041
        %1043 = vmatmul.f32.gmra.mxu0 %v932
        %v1044 = vpop.f32.mrf.mxu0
        %v1045 = vadd.f32 0.0, %v1044
        %1046 = vmatmul.f32.gmra.mxu0 %v935
        %v1047 = vpop.f32.mrf.mxu0
        %v1048 = vadd.f32 0.0, %v1047
        %1049 = vmatmul.f32.gmra.mxu0 %v938
        %v1050 = vpop.f32.mrf.mxu0
        %v1051 = vadd.f32 0.0, %v1050
        %1052 = vmatmul.f32.gmra.mxu0 %v941
        %v1053 = vpop.f32.mrf.mxu0
        %v1054 = vadd.f32 0.0, %v1053
        %1055 = vmatmul.f32.gmra.mxu0 %v944
        %v1056 = vpop.f32.mrf.mxu0
        %v1057 = vadd.f32 0.0, %v1056
        %1058 = vmatmul.f32.gmra.mxu0 %v947
        %v1059 = vpop.f32.mrf.mxu0
        %v1060 = vadd.f32 0.0, %v1059
        %1061 = vmatmul.f32.gmra.mxu0 %v950
        %v1062 = vpop.f32.mrf.mxu0
        %v1063 = vadd.f32 0.0, %v1062
        %1064 = vmatmul.f32.gmra.mxu0 %v953
        %v1065 = vpop.f32.mrf.mxu0
        %v1066 = vadd.f32 0.0, %v1065
        %1067 = vmatmul.f32.gmra.mxu0 %v956
        %v1068 = vpop.f32.mrf.mxu0
        %v1069 = vadd.f32 0.0, %v1068
        %1070 = vmatmul.f32.gmra.mxu0 %v959
        %v1071 = vpop.f32.mrf.mxu0
        %v1072 = vadd.f32 0.0, %v1071
        %1073 = vmatmul.f32.gmra.mxu0 %v962
        %v1074 = vpop.f32.mrf.mxu0
        %v1075 = vadd.f32 0.0, %v1074
        %1076 = vmatmul.f32.gmra.mxu0 %v965
        %v1077 = vpop.f32.mrf.mxu0
        %v1078 = vadd.f32 0.0, %v1077
        %1079 = vmatmul.f32.gmra.mxu0 %v968
        %v1080 = vpop.f32.mrf.mxu0
        %v1081 = vadd.f32 0.0, %v1080
        %1082 = vmatmul.f32.gmra.mxu0 %v971
        %v1083 = vpop.f32.mrf.mxu0
        %v1084 = vadd.f32 0.0, %v1083
        %1085 = vmatmul.f32.gmra.mxu0 %v974
        %v1086 = vpop.f32.mrf.mxu0
        %v1087 = vadd.f32 0.0, %v1086
        %1088 = vdwg.mxu0
        %v1089 = vadd.f32 %v815, %v994
        %v1090 = vadd.f32 %v816, %v997
        %v1091 = vadd.f32 %v817, %v1000
        %v1092 = vadd.f32 %v818, %v1003
        %v1093 = vadd.f32 %v819, %v1006
        %v1094 = vadd.f32 %v820, %v1009
        %v1095 = vadd.f32 %v821, %v1012
        %v1096 = vadd.f32 %v822, %v1015
        %v1097 = vadd.f32 %v823, %v1018
        %v1098 = vadd.f32 %v824, %v1021
        %v1099 = vadd.f32 %v825, %v1024
        %v1100 = vadd.f32 %v826, %v1027
        %v1101 = vadd.f32 %v827, %v1030
        %v1102 = vadd.f32 %v828, %v1033
        %v1103 = vadd.f32 %v829, %v1036
        %v1104 = vadd.f32 %v830, %v1039
        %v1105 = vadd.f32 %v831, %v1042
        %v1106 = vadd.f32 %v832, %v1045
        %v1107 = vadd.f32 %v833, %v1048
        %v1108 = vadd.f32 %v834, %v1051
        %v1109 = vadd.f32 %v835, %v1054
        %v1110 = vadd.f32 %v836, %v1057
        %v1111 = vadd.f32 %v837, %v1060
        %v1112 = vadd.f32 %v838, %v1063
        %v1113 = vadd.f32 %v839, %v1066
        %v1114 = vadd.f32 %v840, %v1069
        %v1115 = vadd.f32 %v841, %v1072
        %v1116 = vadd.f32 %v842, %v1075
        %v1117 = vadd.f32 %v843, %v1078
        %v1118 = vadd.f32 %v844, %v1081
        %v1119 = vadd.f32 %v845, %v1084
        %v1120 = vadd.f32 %v846, %v1087
        %1121 = vst.msk [vmem:[%s190] sm:$0xff] %vm738, %v1089
        %1122 = vst.msk [vmem:[%s190 + $0x8] sm:$0xff] %vm738, %v1090
        %1123 = vst.msk [vmem:[%s190 + $0x10] sm:$0xff] %vm738, %v1091
        %1124 = vst.msk [vmem:[%s190 + $0x18] sm:$0xff] %vm738, %v1092
        %1125 = vst.msk [vmem:[%s190 + $0x20] sm:$0xff] %vm738, %v1093
        %1126 = vst.msk [vmem:[%s190 + $0x28] sm:$0xff] %vm738, %v1094
        %1127 = vst.msk [vmem:[%s190 + $0x30] sm:$0xff] %vm738, %v1095
        %1128 = vst.msk [vmem:[%s190 + $0x38] sm:$0xff] %vm738, %v1096
        %1129 = vst.msk [vmem:[%s190 + $0x40] sm:$0xff] %vm738, %v1097
        %1130 = vst.msk [vmem:[%s190 + $0x48] sm:$0xff] %vm738, %v1098
        %1131 = vst.msk [vmem:[%s190 + $0x50] sm:$0xff] %vm738, %v1099
        %1132 = vst.msk [vmem:[%s190 + $0x58] sm:$0xff] %vm738, %v1100
        %1133 = vst.msk [vmem:[%s190 + $0x60] sm:$0xff] %vm738, %v1101
        %1134 = vst.msk [vmem:[%s190 + $0x68] sm:$0xff] %vm738, %v1102
        %1135 = vst.msk [vmem:[%s190 + $0x70] sm:$0xff] %vm738, %v1103
        %1136 = vst.msk [vmem:[%s190 + $0x78] sm:$0xff] %vm738, %v1104
        %1137 = vst.msk [vmem:[%s190 + $0x80] sm:$0xff] %vm738, %v1105
        %1138 = vst.msk [vmem:[%s190 + $0x88] sm:$0xff] %vm738, %v1106
        %1139 = vst.msk [vmem:[%s190 + $0x90] sm:$0xff] %vm738, %v1107
        %1140 = vst.msk [vmem:[%s190 + $0x98] sm:$0xff] %vm738, %v1108
        %1141 = vst.msk [vmem:[%s190 + $0xa0] sm:$0xff] %vm738, %v1109
        %1142 = vst.msk [vmem:[%s190 + $0xa8] sm:$0xff] %vm738, %v1110
        %1143 = vst.msk [vmem:[%s190 + $0xb0] sm:$0xff] %vm738, %v1111
        %1144 = vst.msk [vmem:[%s190 + $0xb8] sm:$0xff] %vm738, %v1112
        %1145 = vst.msk [vmem:[%s190 + $0xc0] sm:$0xff] %vm738, %v1113
        %1146 = vst.msk [vmem:[%s190 + $0xc8] sm:$0xff] %vm738, %v1114
        %1147 = vst.msk [vmem:[%s190 + $0xd0] sm:$0xff] %vm738, %v1115
        %1148 = vst.msk [vmem:[%s190 + $0xd8] sm:$0xff] %vm738, %v1116
        %1149 = vst.msk [vmem:[%s190 + $0xe0] sm:$0xff] %vm738, %v1117
        %1150 = vst.msk [vmem:[%s190 + $0xe8] sm:$0xff] %vm738, %v1118
        %1151 = vst.msk [vmem:[%s190 + $0xf0] sm:$0xff] %vm738, %v1119
        %1152 = vst.msk [vmem:[%s190 + $0xf8] sm:$0xff] %vm738, %v1120
        %s1153 = scalar_lea.vmem %s1, 32
        %v1154 = vld [vmem:[%s1153] sm:$0xff]
        %v1155 = vld [vmem:[%s1153 + $0x8] sm:$0xff]
        %1156 = vmatpush.msra.mxu0 0.0
        %1157 = vmatpush.msra.mxu0 0.0
        %1158 = vmatpush.msra.mxu0 0.0
        %1159 = vmatpush.msra.mxu0 0.0
        %1160 = vmatpush.msra.mxu0 0.0
        %1161 = vmatpush.msra.mxu0 0.0
        %1162 = vmatpush.msra.mxu0 0.0
        %1163 = vmatpush.msra.mxu0 0.0
        %1164 = vmatpush.msra.mxu0 0.0
        %1165 = vmatpush.msra.mxu0 0.0
        %1166 = vmatpush.msra.mxu0 0.0
        %1167 = vmatpush.msra.mxu0 0.0
        %1168 = vmatpush.msra.mxu0 0.0
        %1169 = vmatpush.msra.mxu0 0.0
        %1170 = vmatpush.msra.mxu0 %v1155
        %1171 = vmatpush.msra.mxu0 %v1154
        %1172 = vmatmul.f32.gmra.mxu0 %v208
        %v1173 = vpop.f32.mrf.mxu0
        %v1174 = vadd.f32 0.0, %v1173
        %1175 = vmatmul.f32.gmra.mxu0 %v211
        %v1176 = vpop.f32.mrf.mxu0
        %v1177 = vadd.f32 0.0, %v1176
        %1178 = vmatmul.f32.gmra.mxu0 %v214
        %v1179 = vpop.f32.mrf.mxu0
        %v1180 = vadd.f32 0.0, %v1179
        %1181 = vmatmul.f32.gmra.mxu0 %v217
        %v1182 = vpop.f32.mrf.mxu0
        %v1183 = vadd.f32 0.0, %v1182
        %1184 = vmatmul.f32.gmra.mxu0 %v220
        %v1185 = vpop.f32.mrf.mxu0
        %v1186 = vadd.f32 0.0, %v1185
        %1187 = vmatmul.f32.gmra.mxu0 %v223
        %v1188 = vpop.f32.mrf.mxu0
        %v1189 = vadd.f32 0.0, %v1188
        %1190 = vmatmul.f32.gmra.mxu0 %v226
        %v1191 = vpop.f32.mrf.mxu0
        %v1192 = vadd.f32 0.0, %v1191
        %1193 = vmatmul.f32.gmra.mxu0 %v229
        %v1194 = vpop.f32.mrf.mxu0
        %v1195 = vadd.f32 0.0, %v1194
        %1196 = vdwg.mxu0
        %v1197 = vld [vmem:[%s190] sm:$0xff]
        %v1198 = vld [vmem:[%s190 + $0x8] sm:$0xff]
        %v1199 = vld [vmem:[%s190 + $0x10] sm:$0xff]
        %v1200 = vld [vmem:[%s190 + $0x18] sm:$0xff]
        %v1201 = vld [vmem:[%s190 + $0x20] sm:$0xff]
        %v1202 = vld [vmem:[%s190 + $0x28] sm:$0xff]
        %v1203 = vld [vmem:[%s190 + $0x30] sm:$0xff]
        %v1204 = vld [vmem:[%s190 + $0x38] sm:$0xff]
        %v1205 = vld [vmem:[%s190 + $0x40] sm:$0xff]
        %v1206 = vld [vmem:[%s190 + $0x48] sm:$0xff]
        %v1207 = vld [vmem:[%s190 + $0x50] sm:$0xff]
        %v1208 = vld [vmem:[%s190 + $0x58] sm:$0xff]
        %v1209 = vld [vmem:[%s190 + $0x60] sm:$0xff]
        %v1210 = vld [vmem:[%s190 + $0x68] sm:$0xff]
        %v1211 = vld [vmem:[%s190 + $0x70] sm:$0xff]
        %v1212 = vld [vmem:[%s190 + $0x78] sm:$0xff]
        %v1213 = vld [vmem:[%s190 + $0x80] sm:$0xff]
        %v1214 = vld [vmem:[%s190 + $0x88] sm:$0xff]
        %v1215 = vld [vmem:[%s190 + $0x90] sm:$0xff]
        %v1216 = vld [vmem:[%s190 + $0x98] sm:$0xff]
        %v1217 = vld [vmem:[%s190 + $0xa0] sm:$0xff]
        %v1218 = vld [vmem:[%s190 + $0xa8] sm:$0xff]
        %v1219 = vld [vmem:[%s190 + $0xb0] sm:$0xff]
        %v1220 = vld [vmem:[%s190 + $0xb8] sm:$0xff]
        %v1221 = vld [vmem:[%s190 + $0xc0] sm:$0xff]
        %v1222 = vld [vmem:[%s190 + $0xc8] sm:$0xff]
        %v1223 = vld [vmem:[%s190 + $0xd0] sm:$0xff]
        %v1224 = vld [vmem:[%s190 + $0xd8] sm:$0xff]
        %v1225 = vld [vmem:[%s190 + $0xe0] sm:$0xff]
        %v1226 = vld [vmem:[%s190 + $0xe8] sm:$0xff]
        %v1227 = vld [vmem:[%s190 + $0xf0] sm:$0xff]
        %v1228 = vld [vmem:[%s190 + $0xf8] sm:$0xff]
        %s1229 = scalar_lea.vmem %s2, 512
        %v1230 = vld [vmem:[%s1229] sm:$0xff]
        %v1231 = vld [vmem:[%s1229 + $0x8] sm:$0xff]
        %v1232 = vld [vmem:[%s1229 + $0x10] sm:$0xff]
        %v1233 = vld [vmem:[%s1229 + $0x18] sm:$0xff]
        %v1234 = vld [vmem:[%s1229 + $0x20] sm:$0xff]
        %v1235 = vld [vmem:[%s1229 + $0x28] sm:$0xff]
        %v1236 = vld [vmem:[%s1229 + $0x30] sm:$0xff]
        %v1237 = vld [vmem:[%s1229 + $0x38] sm:$0xff]
        %v1238 = vld [vmem:[%s1229 + $0x40] sm:$0xff]
        %v1239 = vld [vmem:[%s1229 + $0x48] sm:$0xff]
        %v1240 = vld [vmem:[%s1229 + $0x50] sm:$0xff]
        %v1241 = vld [vmem:[%s1229 + $0x58] sm:$0xff]
        %v1242 = vld [vmem:[%s1229 + $0x60] sm:$0xff]
        %v1243 = vld [vmem:[%s1229 + $0x68] sm:$0xff]
        %v1244 = vld [vmem:[%s1229 + $0x70] sm:$0xff]
        %v1245 = vld [vmem:[%s1229 + $0x78] sm:$0xff]
        %v1246 = vld [vmem:[%s1229 + $0x80] sm:$0xff]
        %v1247 = vld [vmem:[%s1229 + $0x88] sm:$0xff]
        %v1248 = vld [vmem:[%s1229 + $0x90] sm:$0xff]
        %v1249 = vld [vmem:[%s1229 + $0x98] sm:$0xff]
        %v1250 = vld [vmem:[%s1229 + $0xa0] sm:$0xff]
        %v1251 = vld [vmem:[%s1229 + $0xa8] sm:$0xff]
        %v1252 = vld [vmem:[%s1229 + $0xb0] sm:$0xff]
        %v1253 = vld [vmem:[%s1229 + $0xb8] sm:$0xff]
        %v1254 = vld [vmem:[%s1229 + $0xc0] sm:$0xff]
        %v1255 = vld [vmem:[%s1229 + $0xc8] sm:$0xff]
        %v1256 = vld [vmem:[%s1229 + $0xd0] sm:$0xff]
        %v1257 = vld [vmem:[%s1229 + $0xd8] sm:$0xff]
        %v1258 = vld [vmem:[%s1229 + $0xe0] sm:$0xff]
        %v1259 = vld [vmem:[%s1229 + $0xe8] sm:$0xff]
        %v1260 = vld [vmem:[%s1229 + $0xf0] sm:$0xff]
        %v1261 = vld [vmem:[%s1229 + $0xf8] sm:$0xff]
        %v1263 = vsel %vm336, %v1230, 0
        %v1266 = vsel %vm336, %v1231, 0
        %v1269 = vsel %vm336, %v1232, 0
        %v1272 = vsel %vm336, %v1233, 0
        %v1275 = vsel %vm336, %v1234, 0
        %v1278 = vsel %vm336, %v1235, 0
        %v1281 = vsel %vm336, %v1236, 0
        %v1284 = vsel %vm336, %v1237, 0
        %v1287 = vsel %vm336, %v1238, 0
        %v1290 = vsel %vm336, %v1239, 0
        %v1293 = vsel %vm336, %v1240, 0
        %v1296 = vsel %vm336, %v1241, 0
        %v1299 = vsel %vm336, %v1242, 0
        %v1302 = vsel %vm336, %v1243, 0
        %v1305 = vsel %vm336, %v1244, 0
        %v1308 = vsel %vm336, %v1245, 0
        %v1311 = vsel %vm336, %v1246, 0
        %v1314 = vsel %vm336, %v1247, 0
        %v1317 = vsel %vm336, %v1248, 0
        %v1320 = vsel %vm336, %v1249, 0
        %v1323 = vsel %vm336, %v1250, 0
        %v1326 = vsel %vm336, %v1251, 0
        %v1329 = vsel %vm336, %v1252, 0
        %v1332 = vsel %vm336, %v1253, 0
        %v1335 = vsel %vm336, %v1254, 0
        %v1338 = vsel %vm336, %v1255, 0
        %v1341 = vsel %vm336, %v1256, 0
        %v1344 = vsel %vm336, %v1257, 0
        %v1347 = vsel %vm336, %v1258, 0
        %v1350 = vsel %vm336, %v1259, 0
        %v1353 = vsel %vm336, %v1260, 0
        %v1356 = vsel %vm336, %v1261, 0
        %1358 = vmatpush.msra.mxu0 0.0
        %1359 = vmatpush.msra.mxu0 0.0
        %1360 = vmatpush.msra.mxu0 0.0
        %1361 = vmatpush.msra.mxu0 0.0
        %1362 = vmatpush.msra.mxu0 0.0
        %1363 = vmatpush.msra.mxu0 0.0
        %1364 = vmatpush.msra.mxu0 0.0
        %1365 = vmatpush.msra.mxu0 0.0
        %1366 = vmatpush.msra.mxu0 %v1195
        %1367 = vmatpush.msra.mxu0 %v1192
        %1368 = vmatpush.msra.mxu0 %v1189
        %1369 = vmatpush.msra.mxu0 %v1186
        %1370 = vmatpush.msra.mxu0 %v1183
        %1371 = vmatpush.msra.mxu0 %v1180
        %1372 = vmatpush.msra.mxu0 %v1177
        %1373 = vmatpush.msra.mxu0 %v1174
        %1374 = vmatmul.f32.gmra.mxu0 %v1263
        %v1375 = vpop.f32.mrf.mxu0
        %v1376 = vadd.f32 0.0, %v1375
        %1377 = vmatmul.f32.gmra.mxu0 %v1266
        %v1378 = vpop.f32.mrf.mxu0
        %v1379 = vadd.f32 0.0, %v1378
        %1380 = vmatmul.f32.gmra.mxu0 %v1269
        %v1381 = vpop.f32.mrf.mxu0
        %v1382 = vadd.f32 0.0, %v1381
        %1383 = vmatmul.f32.gmra.mxu0 %v1272
        %v1384 = vpop.f32.mrf.mxu0
        %v1385 = vadd.f32 0.0, %v1384
        %1386 = vmatmul.f32.gmra.mxu0 %v1275
        %v1387 = vpop.f32.mrf.mxu0
        %v1388 = vadd.f32 0.0, %v1387
        %1389 = vmatmul.f32.gmra.mxu0 %v1278
        %v1390 = vpop.f32.mrf.mxu0
        %v1391 = vadd.f32 0.0, %v1390
        %1392 = vmatmul.f32.gmra.mxu0 %v1281
        %v1393 = vpop.f32.mrf.mxu0
        %v1394 = vadd.f32 0.0, %v1393
        %1395 = vmatmul.f32.gmra.mxu0 %v1284
        %v1396 = vpop.f32.mrf.mxu0
        %v1397 = vadd.f32 0.0, %v1396
        %1398 = vmatmul.f32.gmra.mxu0 %v1287
        %v1399 = vpop.f32.mrf.mxu0
        %v1400 = vadd.f32 0.0, %v1399
        %1401 = vmatmul.f32.gmra.mxu0 %v1290
        %v1402 = vpop.f32.mrf.mxu0
        %v1403 = vadd.f32 0.0, %v1402
        %1404 = vmatmul.f32.gmra.mxu0 %v1293
        %v1405 = vpop.f32.mrf.mxu0
        %v1406 = vadd.f32 0.0, %v1405
        %1407 = vmatmul.f32.gmra.mxu0 %v1296
        %v1408 = vpop.f32.mrf.mxu0
        %v1409 = vadd.f32 0.0, %v1408
        %1410 = vmatmul.f32.gmra.mxu0 %v1299
        %v1411 = vpop.f32.mrf.mxu0
        %v1412 = vadd.f32 0.0, %v1411
        %1413 = vmatmul.f32.gmra.mxu0 %v1302
        %v1414 = vpop.f32.mrf.mxu0
        %v1415 = vadd.f32 0.0, %v1414
        %1416 = vmatmul.f32.gmra.mxu0 %v1305
        %v1417 = vpop.f32.mrf.mxu0
        %v1418 = vadd.f32 0.0, %v1417
        %1419 = vmatmul.f32.gmra.mxu0 %v1308
        %v1420 = vpop.f32.mrf.mxu0
        %v1421 = vadd.f32 0.0, %v1420
        %1422 = vmatmul.f32.gmra.mxu0 %v1311
        %v1423 = vpop.f32.mrf.mxu0
        %v1424 = vadd.f32 0.0, %v1423
        %1425 = vmatmul.f32.gmra.mxu0 %v1314
        %v1426 = vpop.f32.mrf.mxu0
        %v1427 = vadd.f32 0.0, %v1426
        %1428 = vmatmul.f32.gmra.mxu0 %v1317
        %v1429 = vpop.f32.mrf.mxu0
        %v1430 = vadd.f32 0.0, %v1429
        %1431 = vmatmul.f32.gmra.mxu0 %v1320
        %v1432 = vpop.f32.mrf.mxu0
        %v1433 = vadd.f32 0.0, %v1432
        %1434 = vmatmul.f32.gmra.mxu0 %v1323
        %v1435 = vpop.f32.mrf.mxu0
        %v1436 = vadd.f32 0.0, %v1435
        %1437 = vmatmul.f32.gmra.mxu0 %v1326
        %v1438 = vpop.f32.mrf.mxu0
        %v1439 = vadd.f32 0.0, %v1438
        %1440 = vmatmul.f32.gmra.mxu0 %v1329
        %v1441 = vpop.f32.mrf.mxu0
        %v1442 = vadd.f32 0.0, %v1441
        %1443 = vmatmul.f32.gmra.mxu0 %v1332
        %v1444 = vpop.f32.mrf.mxu0
        %v1445 = vadd.f32 0.0, %v1444
        %1446 = vmatmul.f32.gmra.mxu0 %v1335
        %v1447 = vpop.f32.mrf.mxu0
        %v1448 = vadd.f32 0.0, %v1447
        %1449 = vmatmul.f32.gmra.mxu0 %v1338
        %v1450 = vpop.f32.mrf.mxu0
        %v1451 = vadd.f32 0.0, %v1450
        %1452 = vmatmul.f32.gmra.mxu0 %v1341
        %v1453 = vpop.f32.mrf.mxu0
        %v1454 = vadd.f32 0.0, %v1453
        %1455 = vmatmul.f32.gmra.mxu0 %v1344
        %v1456 = vpop.f32.mrf.mxu0
        %v1457 = vadd.f32 0.0, %v1456
        %1458 = vmatmul.f32.gmra.mxu0 %v1347
        %v1459 = vpop.f32.mrf.mxu0
        %v1460 = vadd.f32 0.0, %v1459
        %1461 = vmatmul.f32.gmra.mxu0 %v1350
        %v1462 = vpop.f32.mrf.mxu0
        %v1463 = vadd.f32 0.0, %v1462
        %1464 = vmatmul.f32.gmra.mxu0 %v1353
        %v1465 = vpop.f32.mrf.mxu0
        %v1466 = vadd.f32 0.0, %v1465
        %1467 = vmatmul.f32.gmra.mxu0 %v1356
        %v1468 = vpop.f32.mrf.mxu0
        %v1469 = vadd.f32 0.0, %v1468
        %1470 = vdwg.mxu0
        %v1471 = vadd.f32 %v1197, %v1376
        %v1472 = vadd.f32 %v1198, %v1379
        %v1473 = vadd.f32 %v1199, %v1382
        %v1474 = vadd.f32 %v1200, %v1385
        %v1475 = vadd.f32 %v1201, %v1388
        %v1476 = vadd.f32 %v1202, %v1391
        %v1477 = vadd.f32 %v1203, %v1394
        %v1478 = vadd.f32 %v1204, %v1397
        %v1479 = vadd.f32 %v1205, %v1400
        %v1480 = vadd.f32 %v1206, %v1403
        %v1481 = vadd.f32 %v1207, %v1406
        %v1482 = vadd.f32 %v1208, %v1409
        %v1483 = vadd.f32 %v1209, %v1412
        %v1484 = vadd.f32 %v1210, %v1415
        %v1485 = vadd.f32 %v1211, %v1418
        %v1486 = vadd.f32 %v1212, %v1421
        %v1487 = vadd.f32 %v1213, %v1424
        %v1488 = vadd.f32 %v1214, %v1427
        %v1489 = vadd.f32 %v1215, %v1430
        %v1490 = vadd.f32 %v1216, %v1433
        %v1491 = vadd.f32 %v1217, %v1436
        %v1492 = vadd.f32 %v1218, %v1439
        %v1493 = vadd.f32 %v1219, %v1442
        %v1494 = vadd.f32 %v1220, %v1445
        %v1495 = vadd.f32 %v1221, %v1448
        %v1496 = vadd.f32 %v1222, %v1451
        %v1497 = vadd.f32 %v1223, %v1454
        %v1498 = vadd.f32 %v1224, %v1457
        %v1499 = vadd.f32 %v1225, %v1460
        %v1500 = vadd.f32 %v1226, %v1463
        %v1501 = vadd.f32 %v1227, %v1466
        %v1502 = vadd.f32 %v1228, %v1469
        %1503 = vst.msk [vmem:[%s190] sm:$0xff] %vm738, %v1471
        %1504 = vst.msk [vmem:[%s190 + $0x8] sm:$0xff] %vm738, %v1472
        %1505 = vst.msk [vmem:[%s190 + $0x10] sm:$0xff] %vm738, %v1473
        %1506 = vst.msk [vmem:[%s190 + $0x18] sm:$0xff] %vm738, %v1474
        %1507 = vst.msk [vmem:[%s190 + $0x20] sm:$0xff] %vm738, %v1475
        %1508 = vst.msk [vmem:[%s190 + $0x28] sm:$0xff] %vm738, %v1476
        %1509 = vst.msk [vmem:[%s190 + $0x30] sm:$0xff] %vm738, %v1477
        %1510 = vst.msk [vmem:[%s190 + $0x38] sm:$0xff] %vm738, %v1478
        %1511 = vst.msk [vmem:[%s190 + $0x40] sm:$0xff] %vm738, %v1479
        %1512 = vst.msk [vmem:[%s190 + $0x48] sm:$0xff] %vm738, %v1480
        %1513 = vst.msk [vmem:[%s190 + $0x50] sm:$0xff] %vm738, %v1481
        %1514 = vst.msk [vmem:[%s190 + $0x58] sm:$0xff] %vm738, %v1482
        %1515 = vst.msk [vmem:[%s190 + $0x60] sm:$0xff] %vm738, %v1483
        %1516 = vst.msk [vmem:[%s190 + $0x68] sm:$0xff] %vm738, %v1484
        %1517 = vst.msk [vmem:[%s190 + $0x70] sm:$0xff] %vm738, %v1485
        %1518 = vst.msk [vmem:[%s190 + $0x78] sm:$0xff] %vm738, %v1486
        %1519 = vst.msk [vmem:[%s190 + $0x80] sm:$0xff] %vm738, %v1487
        %1520 = vst.msk [vmem:[%s190 + $0x88] sm:$0xff] %vm738, %v1488
        %1521 = vst.msk [vmem:[%s190 + $0x90] sm:$0xff] %vm738, %v1489
        %1522 = vst.msk [vmem:[%s190 + $0x98] sm:$0xff] %vm738, %v1490
        %1523 = vst.msk [vmem:[%s190 + $0xa0] sm:$0xff] %vm738, %v1491
        %1524 = vst.msk [vmem:[%s190 + $0xa8] sm:$0xff] %vm738, %v1492
        %1525 = vst.msk [vmem:[%s190 + $0xb0] sm:$0xff] %vm738, %v1493
        %1526 = vst.msk [vmem:[%s190 + $0xb8] sm:$0xff] %vm738, %v1494
        %1527 = vst.msk [vmem:[%s190 + $0xc0] sm:$0xff] %vm738, %v1495
        %1528 = vst.msk [vmem:[%s190 + $0xc8] sm:$0xff] %vm738, %v1496
        %1529 = vst.msk [vmem:[%s190 + $0xd0] sm:$0xff] %vm738, %v1497
        %1530 = vst.msk [vmem:[%s190 + $0xd8] sm:$0xff] %vm738, %v1498
        %1531 = vst.msk [vmem:[%s190 + $0xe0] sm:$0xff] %vm738, %v1499
        %1532 = vst.msk [vmem:[%s190 + $0xe8] sm:$0xff] %vm738, %v1500
        %1533 = vst.msk [vmem:[%s190 + $0xf0] sm:$0xff] %vm738, %v1501
        %1534 = vst.msk [vmem:[%s190 + $0xf8] sm:$0xff] %vm738, %v1502
        %s1535 = sand.u32 %s115, 1
        %s1536 = scalar_lea.sflag [#allocation3], %s1535
        %s1537 = sand.u32 %s115, 1
        %s1538 = smul.addr %s1537, 256
        %s1539 = scalar_lea.vmem [#allocation2], %s1538
        // Predicated region
        $region37: #{upsample_conv_forward.1} parent=35 // pred_check
          %p1540 = pneg %p125
        $region38: #{upsample_conv_forward.1} parent=35 // pred_check_branch
          %1542 = sbr.rel (%p1540) target = $region40
        $region39: #{upsample_conv_forward.1} parent=35 // pred_region
          %1544 = vsyncadd %s1536, 0
          %s1545 = smul.addr %s18, 32
          %s1546 = smul.addr %s1545, 8
          %s1547 = scalar_lea.hbm %s4, %s1546
          %s1548 = sshll.u32 %s1539, 4
          %s1549 = int_to_ptr.vmem [resolvable:$true] %s1548
          %s1550 = sshll.u32 %s1547, 4
          %s1551 = int_to_ptr.hbm [resolvable:$true] %s1550
          %1556 = dma.vmem_to_hbm [thread:$0]  %s1549, 4096, %s1551, %s1536, 128, 128, 8
        $region40: #{upsample_conv_forward.1} parent=35 // pred_fallthru
          _
      $region36: #{upsample_conv_forward.1} parent=5 // pred_fallthru
        _
      %p1557 = scmp.le.s32.totalorder 2, %s13
      // Predicated region
      $region41: #{upsample_conv_forward.1} parent=5 // pred_check
        %p1558 = pneg %p1557
      $region42: #{upsample_conv_forward.1} parent=5 // pred_check_branch
        %1560 = sbr.rel (%p1558) target = $region44
      $region43: #{upsample_conv_forward.1} parent=5 // pred_region
        %s1561 = ssub.s32 %s13, 2
        // Predicated region
        $region45: #{upsample_conv_forward.1} parent=43 // pred_check
          %p1562 = pneg %p131
        $region46: #{upsample_conv_forward.1} parent=43 // pred_check_branch
          %1564 = sbr.rel (%p1562) target = $region48
        $region47: #{upsample_conv_forward.1} parent=43 // pred_region
          %s1565 = sand.u32 %s116, 1
          %s1566 = scalar_lea.sflag [#allocation3], %s1565
          %s1567 = sand.u32 %s116, 1
          %s1568 = smul.addr %s1567, 256
          %s1569 = scalar_lea.vmem [#allocation2], %s1568
          %1571 = dma.done %s1566, 4096
        $region48: #{upsample_conv_forward.1} parent=43 // pred_fallthru
          _
      $region44: #{upsample_conv_forward.1} parent=5 // pred_fallthru
        _
    $region6: #{upsample_conv_forward.1} parent=1 // loop_footer
      %s17 = sadd.s32 1, %s13
    $region7: #{upsample_conv_forward.1} parent=1 // loop_footer_branch
      %12 = sbr.rel target = $region3
    $region8: #{upsample_conv_forward.1} parent=1 // loop_exit
      _
    %1572 = vsyncpa [#allocation3], 1
    %s1573 = scalar_lea.sflag [#allocation3], 1
    %1574 = vsyncpa %s1573, 1

</llo_original>
